<compile_context>
chip_gen: v7x
topology: tpu7x:2x2x1
jax: 0.10.0
libtpu: 0.0.40
codegen_flags: <defaults>
</compile_context>

<pallas_src>
import functools

import jax
import jax.numpy as jnp
from jax.experimental import pallas as pl
from jax.experimental.pallas import tpu as pltpu

BN_EPS = 1e-5


# ----------------------------------------------------------------------------
# Fused kernel: expand 1x1 -> dw3x3 -> project 1x1 (+ residual),
# one batch element per grid step.  BN scales are pre-folded into the weights.
# ----------------------------------------------------------------------------
def _fused_block_kernel(x_ref, w1_ref, w2_ref, w3_ref, b12_ref, b3_ref,
                        o_ref, pad_ref, *, stride, h, w, ho, wo, shortcut):
    """Refs:
      x_ref   : (1, Cin, H*W)    NCHW-flattened input (matmul input + residual)
      w1_ref  : (Cin, c)         1x1 expand weight, BN1 scale folded in
      w2_ref  : (3, 3, c)        depthwise weight (HWC), BN2 scale folded in
      w3_ref  : (Cout, c)        1x1 project weight, BN3 scale folded in
      b12_ref : (2, c)           BN1 / BN2 shifts
      b3_ref  : (Cout, 1)        BN3 shift
      o_ref   : (1, Cout, Ho*Wo) NCHW-flattened output (lane-dense store)
      pad_ref : (H+2, W+2, c) f32 VMEM scratch holding the zero-padded
                expanded activation (never written to HBM).
    """
    c = w1_ref.shape[1]

    # Zero only the 1-pixel border each step; the interior is fully rewritten
    # below.  Done per-step (not at program_id==0) so it stays correct when
    # the 'parallel' grid axis is sharded across TensorCores.
    zrow = jnp.zeros((1, w + 2, c), jnp.float32)
    zcol = jnp.zeros((h + 2, 1, c), jnp.float32)
    pad_ref[0:1, :, :] = zrow
    pad_ref[h + 1:h + 2, :, :] = zrow
    pad_ref[:, 0:1, :] = zcol
    pad_ref[:, w + 1:w + 2, :] = zcol

    # ---- Stage 1: 1x1 expand conv (+folded BN scale) + shift + ReLU6.
    # x block is NCHW (Cin, H*W); contract over dim 0 of both operands
    # (transposed-LHS matmul) -> (H*W, c), no host or in-kernel transpose.
    x2d = x_ref[0]
    y1 = jax.lax.dot_general(x2d, w1_ref[...], (((0,), (0,)), ((), ())),
                             preferred_element_type=jnp.float32)      # (H*W, c)
    y1 = jnp.clip(y1 + b12_ref[0:1, :], 0.0, 6.0)

    pad_ref[1:h + 1, 1:w + 1, :] = y1.reshape(h, w, c)

    # ---- Stage 2: depthwise 3x3 (stride, pad=1, folded BN scale) + ReLU6.
    w2 = w2_ref[...]                                                  # (3, 3, c)
    acc = jnp.zeros((ho, wo, c), jnp.float32)
    for kh in range(3):
        for kw in range(3):
            if stride == 1:
                tap = pad_ref[pl.ds(kh, ho), pl.ds(kw, wo), :]
            else:
                # Strided ref read: no 4x over-read + per-tap re-layout.
                tap = pad_ref[pl.ds(kh, ho, stride), pl.ds(kw, wo, stride), :]
            acc = acc + tap * w2[kh, kw]
    y2 = jnp.clip(acc.reshape(ho * wo, c) + b12_ref[1:2, :], 0.0, 6.0)

    # ---- Stage 3: 1x1 project (+folded BN scale) + shift (+ residual).
    # Channel-major so the output store is lane-dense and already NCHW.
    y3 = jax.lax.dot_general(w3_ref[...], y2, (((1,), (1,)), ((), ())),
                             preferred_element_type=jnp.float32)      # (Cout, Ho*Wo)
    y3 = y3 + b3_ref[...]
    if shortcut:
        y3 = y3 + x2d.astype(jnp.float32)
    o_ref[0] = y3.astype(o_ref.dtype)


# ----------------------------------------------------------------------------
# TTBaseBlock: parameter init + forward
# ----------------------------------------------------------------------------
def tt_base_block_init(key, input_channel, output_channel, t=6):
    c = t * input_channel
    ks = jax.random.split(key, 15)
    p = {
        "conv1_w": 0.1 * jax.random.normal(ks[0], (c, input_channel, 1, 1), jnp.float32),
        "conv2_w": 0.1 * jax.random.normal(ks[1], (c, 1, 3, 3), jnp.float32),
        "conv3_w": 0.1 * jax.random.normal(ks[2], (output_channel, c, 1, 1), jnp.float32),
    }
    for idx, (i, ch) in enumerate(((1, c), (2, c), (3, output_channel))):
        base = 3 + 4 * idx
        p[f"bn{i}_gamma"] = 1.0 + 0.1 * jax.random.normal(ks[base + 0], (ch,), jnp.float32)
        p[f"bn{i}_beta"] = 0.1 * jax.random.normal(ks[base + 1], (ch,), jnp.float32)
        p[f"bn{i}_mean"] = 0.1 * jax.random.normal(ks[base + 2], (ch,), jnp.float32)
        p[f"bn{i}_var"] = 1.0 + 0.1 * jnp.abs(jax.random.normal(ks[base + 3], (ch,), jnp.float32))
    return p


def _fold_bn(params, i):
    scale = params[f"bn{i}_gamma"] / jnp.sqrt(params[f"bn{i}_var"] + BN_EPS)
    shift = params[f"bn{i}_beta"] - params[f"bn{i}_mean"] * scale
    return scale, shift


def tt_base_block_forward(params, x_nchw, *, downsample=False):
    stride = 2 if downsample else 1
    n, cin, h, w = x_nchw.shape
    c = params["conv1_w"].shape[0]
    cout = params["conv3_w"].shape[0]
    shortcut = (not downsample) and (cin == cout)
    ho = (h + 2 - 3) // stride + 1
    wo = (w + 2 - 3) // stride + 1

    # Fold the (inference-mode) BN scales into the conv weights host-side
    # (tiny constant tensors); only the shifts remain in-kernel.
    s1, b1 = _fold_bn(params, 1)
    s2, b2 = _fold_bn(params, 2)
    s3, b3 = _fold_bn(params, 3)
    w1 = jnp.transpose(params["conv1_w"][:, :, 0, 0]) * s1[None, :]              # (Cin, c)
    w2 = jnp.transpose(params["conv2_w"][:, 0], (1, 2, 0)) * s2[None, None, :]   # (3, 3, c)
    w3 = params["conv3_w"][:, :, 0, 0] * s3[:, None]                             # (Cout, c)
    b12 = jnp.stack([b1, b2])                                                    # (2, c)
    b3c = b3[:, None]                                                            # (Cout, 1)

    # x fed once, NCHW-flattened (lane-dense last dim H*W); used for both the
    # expand matmul and the residual add inside the kernel.
    x_flat = x_nchw.reshape(n, cin, h * w)

    kernel = functools.partial(_fused_block_kernel, stride=stride,
                               h=h, w=w, ho=ho, wo=wo, shortcut=shortcut)

    out = pl.pallas_call(
        kernel,
        out_shape=jax.ShapeDtypeStruct((n, cout, ho * wo), x_nchw.dtype),
        grid=(n,),
        in_specs=[
            pl.BlockSpec((1, cin, h * w), lambda b: (b, 0, 0)),     # x (NCHW)
            pl.BlockSpec((cin, c), lambda b: (0, 0)),               # w1 (scaled)
            pl.BlockSpec((3, 3, c), lambda b: (0, 0, 0)),           # w2 (scaled)
            pl.BlockSpec((cout, c), lambda b: (0, 0)),              # w3 (scaled)
            pl.BlockSpec((2, c), lambda b: (0, 0)),                 # BN1/BN2 shifts
            pl.BlockSpec((cout, 1), lambda b: (0, 0)),              # BN3 shift
        ],
        out_specs=pl.BlockSpec((1, cout, ho * wo), lambda b: (b, 0, 0)),
        scratch_shapes=[pltpu.VMEM((h + 2, w + 2, c), jnp.float32)],
        compiler_params=pltpu.CompilerParams(
            dimension_semantics=("parallel",)),
    )(x_flat, w1, w2, w3, b12, b3c)
    return out.reshape(n, cout, ho, wo)                             # NCHW


# ----------------------------------------------------------------------------
# Pure-JAX reference (for correctness check)
# ----------------------------------------------------------------------------
def _reference(params, x_nchw, *, downsample=False):
    stride = 2 if downsample else 1

    def bn(y, i):
        g = params[f"bn{i}_gamma"][None, :, None, None]
        b = params[f"bn{i}_beta"][None, :, None, None]
        m = params[f"bn{i}_mean"][None, :, None, None]
        v = params[f"bn{i}_var"][None, :, None, None]
        return (y - m) / jnp.sqrt(v + BN_EPS) * g + b

    dn = ("NCHW", "OIHW", "NCHW")
    c = params["conv2_w"].shape[0]
    y = jax.lax.conv_general_dilated(x_nchw, params["conv1_w"], (1, 1), "VALID",
                                     dimension_numbers=dn)
    y = jnp.clip(bn(y, 1), 0.0, 6.0)
    y = jax.lax.conv_general_dilated(y, params["conv2_w"], (stride, stride),
                                     ((1, 1), (1, 1)), dimension_numbers=dn,
                                     feature_group_count=c)
    y = jnp.clip(bn(y, 2), 0.0, 6.0)
    y = jax.lax.conv_general_dilated(y, params["conv3_w"], (1, 1), "VALID",
                                     dimension_numbers=dn)
    y = bn(y, 3)
    if (not downsample) and x_nchw.shape[1] == y.shape[1]:
        y = y + x_nchw
    return y


if __name__ == "__main__":
    key = jax.random.PRNGKey(0)
    k_param, k_input = jax.random.split(key)

    # Small shapes consistent with the module: N=2, Cin=Cout=4, H=W=16, t=6 -> c=24.
    N, CIN, COUT, H, W, T = 2, 4, 4, 16, 16, 6
    params = tt_base_block_init(k_param, CIN, COUT, t=T)
    x = jax.random.normal(k_input, (N, CIN, H, W), jnp.float32)

    # stride=1 + shortcut path
    out = jax.block_until_ready(tt_base_block_forward(params, x, downsample=False))
    ref = jax.block_until_ready(_reference(params, x, downsample=False))
    assert out.shape == ref.shape, (out.shape, ref.shape)
    assert jnp.allclose(out, ref, atol=2e-2, rtol=2e-2), float(jnp.max(jnp.abs(out - ref)))

    # stride=2 downsample path (no shortcut) — exercises the strided depthwise.
    out_d = jax.block_until_ready(tt_base_block_forward(params, x, downsample=True))
    ref_d = jax.block_until_ready(_reference(params, x, downsample=True))
    assert out_d.shape == ref_d.shape, (out_d.shape, ref_d.shape)
    assert jnp.allclose(out_d, ref_d, atol=2e-2, rtol=2e-2), float(jnp.max(jnp.abs(out_d - ref_d)))

    print("KERNEL_OK")
</pallas_src>

<mosaic_0001>
module attributes {stable_mosaic.version = 11 : i64} {
  func.func @_fused_block_kernel(%arg0: i32, %arg1: memref<1x4x256xf32, #tpu.memory_space<vmem>>, %arg2: memref<4x24xf32, #tpu.memory_space<vmem>>, %arg3: memref<3x3x24xf32, #tpu.memory_space<vmem>>, %arg4: memref<4x24xf32, #tpu.memory_space<vmem>>, %arg5: memref<2x24xf32, #tpu.memory_space<vmem>>, %arg6: memref<4x1xf32, #tpu.memory_space<vmem>>, %arg7: memref<1x4x256xf32, #tpu.memory_space<vmem>>, %arg8: memref<18x18x24xf32, #tpu.memory_space<vmem>>) attributes {dimension_semantics = [#tpu.dimension_semantics<parallel>], iteration_bounds = array<i64: 2>, scalar_prefetch = 0 : i64, scratch_operands = 1 : i64, tpu.core_type = #tpu.core_type<tc>, window_params = [{transform_indices = @transform_0, window_bounds = array<i64: 1, 4, 256>}, {pipeline_mode = #tpu.pipeline_mode<synchronous>, transform_indices = @transform_1, window_bounds = array<i64: 4, 24>}, {pipeline_mode = #tpu.pipeline_mode<synchronous>, transform_indices = @transform_2, window_bounds = array<i64: 3, 3, 24>}, {pipeline_mode = #tpu.pipeline_mode<synchronous>, transform_indices = @transform_3, window_bounds = array<i64: 4, 24>}, {pipeline_mode = #tpu.pipeline_mode<synchronous>, transform_indices = @transform_4, window_bounds = array<i64: 2, 24>}, {pipeline_mode = #tpu.pipeline_mode<synchronous>, transform_indices = @transform_5, window_bounds = array<i64: 4, 1>}, {transform_indices = @transform_6, window_bounds = array<i64: 1, 4, 256>}]} {
    %cst = arith.constant 0.000000e+00 : f32
    %0 = vector.broadcast %cst : f32 to vector<1x18x24xf32>
    %cst_0 = arith.constant 0.000000e+00 : f32
    %1 = vector.broadcast %cst_0 : f32 to vector<18x1x24xf32>
    %c0 = arith.constant 0 : index
    %c0_1 = arith.constant 0 : index
    %c0_2 = arith.constant 0 : index
    %2 = vector.load %arg8[%c0, %c0_1, %c0_2] : memref<18x18x24xf32, #tpu.memory_space<vmem>>, vector<1x18x24xf32>
    tpu.vector_store %arg8[%c0, %c0_1, %c0_2], %0 {strides = array<i32>} : memref<18x18x24xf32, #tpu.memory_space<vmem>>, vector<1x18x24xf32>,
    %c17 = arith.constant 17 : index
    %c0_3 = arith.constant 0 : index
    %c0_4 = arith.constant 0 : index
    %3 = vector.load %arg8[%c17, %c0_3, %c0_4] : memref<18x18x24xf32, #tpu.memory_space<vmem>>, vector<1x18x24xf32>
    tpu.vector_store %arg8[%c17, %c0_3, %c0_4], %0 {strides = array<i32>} : memref<18x18x24xf32, #tpu.memory_space<vmem>>, vector<1x18x24xf32>,
    %c0_5 = arith.constant 0 : index
    %c0_6 = arith.constant 0 : index
    %c0_7 = arith.constant 0 : index
    %4 = vector.load %arg8[%c0_5, %c0_6, %c0_7] : memref<18x18x24xf32, #tpu.memory_space<vmem>>, vector<18x1x24xf32>
    tpu.vector_store %arg8[%c0_5, %c0_6, %c0_7], %1 {strides = array<i32>} : memref<18x18x24xf32, #tpu.memory_space<vmem>>, vector<18x1x24xf32>,
    %c0_8 = arith.constant 0 : index
    %c17_9 = arith.constant 17 : index
    %c0_10 = arith.constant 0 : index
    %5 = vector.load %arg8[%c0_8, %c17_9, %c0_10] : memref<18x18x24xf32, #tpu.memory_space<vmem>>, vector<18x1x24xf32>
    tpu.vector_store %arg8[%c0_8, %c17_9, %c0_10], %1 {strides = array<i32>} : memref<18x18x24xf32, #tpu.memory_space<vmem>>, vector<18x1x24xf32>,
    %c0_11 = arith.constant 0 : index
    %c0_12 = arith.constant 0 : index
    %c0_13 = arith.constant 0 : index
    %6 = vector.load %arg1[%c0_11, %c0_12, %c0_13] : memref<1x4x256xf32, #tpu.memory_space<vmem>>, vector<1x4x256xf32>
    %7 = vector.shape_cast %6 : vector<1x4x256xf32> to vector<4x256xf32>
    %c0_14 = arith.constant 0 : index
    %c0_15 = arith.constant 0 : index
    %8 = vector.load %arg2[%c0_14, %c0_15] : memref<4x24xf32, #tpu.memory_space<vmem>>, vector<4x24xf32>
    %cst_16 = arith.constant dense<0.000000e+00> : vector<256x24xf32>
    %9 = tpu.matmul %7, %8, %cst_16 {dimension_numbers = #tpu.dot_dimension_numbers<[0], [0], [1], [1], [0, 1, 1, 1], [], []>} : vector<4x256xf32>, vector<4x24xf32>, vector<256x24xf32> -> vector<256x24xf32>
    %c0_17 = arith.constant 0 : index
    %c0_18 = arith.constant 0 : index
    %10 = vector.load %arg5[%c0_17, %c0_18] : memref<2x24xf32, #tpu.memory_space<vmem>>, vector<1x24xf32>
    %11 = vector.broadcast %10 : vector<1x24xf32> to vector<256x24xf32>
    %12 = arith.addf %9, %11 : vector<256x24xf32>
    %cst_19 = arith.constant 0.000000e+00 : f32
    %cst_20 = arith.constant 6.000000e+00 : f32
    %13 = vector.broadcast %cst_19 : f32 to vector<256x24xf32>
    %14 = arith.maximumf %13, %12 : vector<256x24xf32>
    %15 = vector.broadcast %cst_20 : f32 to vector<256x24xf32>
    %16 = arith.minimumf %15, %14 : vector<256x24xf32>
    %17 = vector.shape_cast %16 : vector<256x24xf32> to vector<16x16x24xf32>
    %c1 = arith.constant 1 : index
    %c1_21 = arith.constant 1 : index
    %c0_22 = arith.constant 0 : index
    %18 = vector.load %arg8[%c1, %c1_21, %c0_22] : memref<18x18x24xf32, #tpu.memory_space<vmem>>, vector<16x16x24xf32>
    tpu.vector_store %arg8[%c1, %c1_21, %c0_22], %17 {strides = array<i32>} : memref<18x18x24xf32, #tpu.memory_space<vmem>>, vector<16x16x24xf32>,
    %c0_23 = arith.constant 0 : index
    %c0_24 = arith.constant 0 : index
    %c0_25 = arith.constant 0 : index
    %19 = vector.load %arg3[%c0_23, %c0_24, %c0_25] : memref<3x3x24xf32, #tpu.memory_space<vmem>>, vector<3x3x24xf32>
    %cst_26 = arith.constant 0.000000e+00 : f32
    %20 = vector.broadcast %cst_26 : f32 to vector<16x16x24xf32>
    %c0_27 = arith.constant 0 : index
    %c0_28 = arith.constant 0 : index
    %c0_29 = arith.constant 0 : index
    %21 = vector.load %arg8[%c0_27, %c0_28, %c0_29] : memref<18x18x24xf32, #tpu.memory_space<vmem>>, vector<16x16x24xf32>
    %22 = vector.extract_strided_slice %19 {offsets = [0, 0, 0], sizes = [1, 1, 24], strides = [1, 1, 1]} : vector<3x3x24xf32> to vector<1x1x24xf32>
    %23 = vector.shape_cast %22 : vector<1x1x24xf32> to vector<24xf32>
    %24 = vector.shape_cast %23 : vector<24xf32> to vector<1x1x24xf32>
    %25 = vector.broadcast %24 : vector<1x1x24xf32> to vector<16x16x24xf32>
    %26 = arith.mulf %21, %25 : vector<16x16x24xf32>
    %27 = arith.addf %20, %26 : vector<16x16x24xf32>
    %c0_30 = arith.constant 0 : index
    %c1_31 = arith.constant 1 : index
    %c0_32 = arith.constant 0 : index
    %28 = vector.load %arg8[%c0_30, %c1_31, %c0_32] : memref<18x18x24xf32, #tpu.memory_space<vmem>>, vector<16x16x24xf32>
    %29 = vector.extract_strided_slice %19 {offsets = [0, 1, 0], sizes = [1, 1, 24], strides = [1, 1, 1]} : vector<3x3x24xf32> to vector<1x1x24xf32>
    %30 = vector.shape_cast %29 : vector<1x1x24xf32> to vector<24xf32>
    %31 = vector.shape_cast %30 : vector<24xf32> to vector<1x1x24xf32>
    %32 = vector.broadcast %31 : vector<1x1x24xf32> to vector<16x16x24xf32>
    %33 = arith.mulf %28, %32 : vector<16x16x24xf32>
    %34 = arith.addf %27, %33 : vector<16x16x24xf32>
    %c0_33 = arith.constant 0 : index
    %c2 = arith.constant 2 : index
    %c0_34 = arith.constant 0 : index
    %35 = vector.load %arg8[%c0_33, %c2, %c0_34] : memref<18x18x24xf32, #tpu.memory_space<vmem>>, vector<16x16x24xf32>
    %36 = vector.extract_strided_slice %19 {offsets = [0, 2, 0], sizes = [1, 1, 24], strides = [1, 1, 1]} : vector<3x3x24xf32> to vector<1x1x24xf32>
    %37 = vector.shape_cast %36 : vector<1x1x24xf32> to vector<24xf32>
    %38 = vector.shape_cast %37 : vector<24xf32> to vector<1x1x24xf32>
    %39 = vector.broadcast %38 : vector<1x1x24xf32> to vector<16x16x24xf32>
    %40 = arith.mulf %35, %39 : vector<16x16x24xf32>
    %41 = arith.addf %34, %40 : vector<16x16x24xf32>
    %c1_35 = arith.constant 1 : index
    %c0_36 = arith.constant 0 : index
    %c0_37 = arith.constant 0 : index
    %42 = vector.load %arg8[%c1_35, %c0_36, %c0_37] : memref<18x18x24xf32, #tpu.memory_space<vmem>>, vector<16x16x24xf32>
    %43 = vector.extract_strided_slice %19 {offsets = [1, 0, 0], sizes = [1, 1, 24], strides = [1, 1, 1]} : vector<3x3x24xf32> to vector<1x1x24xf32>
    %44 = vector.shape_cast %43 : vector<1x1x24xf32> to vector<24xf32>
    %45 = vector.shape_cast %44 : vector<24xf32> to vector<1x1x24xf32>
    %46 = vector.broadcast %45 : vector<1x1x24xf32> to vector<16x16x24xf32>
    %47 = arith.mulf %42, %46 : vector<16x16x24xf32>
    %48 = arith.addf %41, %47 : vector<16x16x24xf32>
    %c1_38 = arith.constant 1 : index
    %c1_39 = arith.constant 1 : index
    %c0_40 = arith.constant 0 : index
    %49 = vector.load %arg8[%c1_38, %c1_39, %c0_40] : memref<18x18x24xf32, #tpu.memory_space<vmem>>, vector<16x16x24xf32>
    %50 = vector.extract_strided_slice %19 {offsets = [1, 1, 0], sizes = [1, 1, 24], strides = [1, 1, 1]} : vector<3x3x24xf32> to vector<1x1x24xf32>
    %51 = vector.shape_cast %50 : vector<1x1x24xf32> to vector<24xf32>
    %52 = vector.shape_cast %51 : vector<24xf32> to vector<1x1x24xf32>
    %53 = vector.broadcast %52 : vector<1x1x24xf32> to vector<16x16x24xf32>
    %54 = arith.mulf %49, %53 : vector<16x16x24xf32>
    %55 = arith.addf %48, %54 : vector<16x16x24xf32>
    %c1_41 = arith.constant 1 : index
    %c2_42 = arith.constant 2 : index
    %c0_43 = arith.constant 0 : index
    %56 = vector.load %arg8[%c1_41, %c2_42, %c0_43] : memref<18x18x24xf32, #tpu.memory_space<vmem>>, vector<16x16x24xf32>
    %57 = vector.extract_strided_slice %19 {offsets = [1, 2, 0], sizes = [1, 1, 24], strides = [1, 1, 1]} : vector<3x3x24xf32> to vector<1x1x24xf32>
    %58 = vector.shape_cast %57 : vector<1x1x24xf32> to vector<24xf32>
    %59 = vector.shape_cast %58 : vector<24xf32> to vector<1x1x24xf32>
    %60 = vector.broadcast %59 : vector<1x1x24xf32> to vector<16x16x24xf32>
    %61 = arith.mulf %56, %60 : vector<16x16x24xf32>
    %62 = arith.addf %55, %61 : vector<16x16x24xf32>
    %c2_44 = arith.constant 2 : index
    %c0_45 = arith.constant 0 : index
    %c0_46 = arith.constant 0 : index
    %63 = vector.load %arg8[%c2_44, %c0_45, %c0_46] : memref<18x18x24xf32, #tpu.memory_space<vmem>>, vector<16x16x24xf32>
    %64 = vector.extract_strided_slice %19 {offsets = [2, 0, 0], sizes = [1, 1, 24], strides = [1, 1, 1]} : vector<3x3x24xf32> to vector<1x1x24xf32>
    %65 = vector.shape_cast %64 : vector<1x1x24xf32> to vector<24xf32>
    %66 = vector.shape_cast %65 : vector<24xf32> to vector<1x1x24xf32>
    %67 = vector.broadcast %66 : vector<1x1x24xf32> to vector<16x16x24xf32>
    %68 = arith.mulf %63, %67 : vector<16x16x24xf32>
    %69 = arith.addf %62, %68 : vector<16x16x24xf32>
    %c2_47 = arith.constant 2 : index
    %c1_48 = arith.constant 1 : index
    %c0_49 = arith.constant 0 : index
    %70 = vector.load %arg8[%c2_47, %c1_48, %c0_49] : memref<18x18x24xf32, #tpu.memory_space<vmem>>, vector<16x16x24xf32>
    %71 = vector.extract_strided_slice %19 {offsets = [2, 1, 0], sizes = [1, 1, 24], strides = [1, 1, 1]} : vector<3x3x24xf32> to vector<1x1x24xf32>
    %72 = vector.shape_cast %71 : vector<1x1x24xf32> to vector<24xf32>
    %73 = vector.shape_cast %72 : vector<24xf32> to vector<1x1x24xf32>
    %74 = vector.broadcast %73 : vector<1x1x24xf32> to vector<16x16x24xf32>
    %75 = arith.mulf %70, %74 : vector<16x16x24xf32>
    %76 = arith.addf %69, %75 : vector<16x16x24xf32>
    %c2_50 = arith.constant 2 : index
    %c2_51 = arith.constant 2 : index
    %c0_52 = arith.constant 0 : index
    %77 = vector.load %arg8[%c2_50, %c2_51, %c0_52] : memref<18x18x24xf32, #tpu.memory_space<vmem>>, vector<16x16x24xf32>
    %78 = vector.extract_strided_slice %19 {offsets = [2, 2, 0], sizes = [1, 1, 24], strides = [1, 1, 1]} : vector<3x3x24xf32> to vector<1x1x24xf32>
    %79 = vector.shape_cast %78 : vector<1x1x24xf32> to vector<24xf32>
    %80 = vector.shape_cast %79 : vector<24xf32> to vector<1x1x24xf32>
    %81 = vector.broadcast %80 : vector<1x1x24xf32> to vector<16x16x24xf32>
    %82 = arith.mulf %77, %81 : vector<16x16x24xf32>
    %83 = arith.addf %76, %82 : vector<16x16x24xf32>
    %84 = vector.shape_cast %83 : vector<16x16x24xf32> to vector<256x24xf32>
    %c1_53 = arith.constant 1 : index
    %c0_54 = arith.constant 0 : index
    %85 = vector.load %arg5[%c1_53, %c0_54] : memref<2x24xf32, #tpu.memory_space<vmem>>, vector<1x24xf32>
    %86 = vector.broadcast %85 : vector<1x24xf32> to vector<256x24xf32>
    %87 = arith.addf %84, %86 : vector<256x24xf32>
    %cst_55 = arith.constant 0.000000e+00 : f32
    %cst_56 = arith.constant 6.000000e+00 : f32
    %88 = vector.broadcast %cst_55 : f32 to vector<256x24xf32>
    %89 = arith.maximumf %88, %87 : vector<256x24xf32>
    %90 = vector.broadcast %cst_56 : f32 to vector<256x24xf32>
    %91 = arith.minimumf %90, %89 : vector<256x24xf32>
    %c0_57 = arith.constant 0 : index
    %c0_58 = arith.constant 0 : index
    %92 = vector.load %arg4[%c0_57, %c0_58] : memref<4x24xf32, #tpu.memory_space<vmem>>, vector<4x24xf32>
    %cst_59 = arith.constant dense<0.000000e+00> : vector<4x256xf32>
    %93 = tpu.matmul %92, %91, %cst_59 {dimension_numbers = #tpu.dot_dimension_numbers<[1], [1], [0], [0], [0, 0, 1, 0], [], []>} : vector<4x24xf32>, vector<256x24xf32>, vector<4x256xf32> -> vector<4x256xf32>
    %c0_60 = arith.constant 0 : index
    %c0_61 = arith.constant 0 : index
    %94 = vector.load %arg6[%c0_60, %c0_61] : memref<4x1xf32, #tpu.memory_space<vmem>>, vector<4x1xf32>
    %95 = vector.broadcast %94 : vector<4x1xf32> to vector<4x256xf32>
    %96 = arith.addf %93, %95 : vector<4x256xf32>
    %97 = arith.addf %96, %7 : vector<4x256xf32>
    %c0_62 = arith.constant 0 : index
    %c0_63 = arith.constant 0 : index
    %c0_64 = arith.constant 0 : index
    %98 = vector.load %arg7[%c0_62, %c0_63, %c0_64] : memref<1x4x256xf32, #tpu.memory_space<vmem>>, vector<1x4x256xf32>
    %99 = vector.shape_cast %98 : vector<1x4x256xf32> to vector<4x256xf32>
    %100 = vector.shape_cast %97 : vector<4x256xf32> to vector<1x4x256xf32>
    tpu.vector_store %arg7[%c0_62, %c0_63, %c0_64], %100 {strides = array<i32>} : memref<1x4x256xf32, #tpu.memory_space<vmem>>, vector<1x4x256xf32>,
    return
  }
  func.func @transform_0(%arg0: i32) -> (i32, i32, i32) {
    %c0_i32 = arith.constant 0 : i32
    %c0_i32_0 = arith.constant 0 : i32
    %c0_i32_1 = arith.constant 0 : i32
    return %arg0, %c0_i32, %c0_i32_0 : i32, i32, i32
  }
  func.func @transform_1(%arg0: i32) -> (i32, i32) {
    %c0_i32 = arith.constant 0 : i32
    %c0_i32_0 = arith.constant 0 : i32
    %c0_i32_1 = arith.constant 0 : i32
    return %c0_i32, %c0_i32_0 : i32, i32
  }
  func.func @transform_2(%arg0: i32) -> (i32, i32, i32) {
    %c0_i32 = arith.constant 0 : i32
    %c0_i32_0 = arith.constant 0 : i32
    %c0_i32_1 = arith.constant 0 : i32
    %c0_i32_2 = arith.constant 0 : i32
    return %c0_i32, %c0_i32_0, %c0_i32_1 : i32, i32, i32
  }
  func.func @transform_3(%arg0: i32) -> (i32, i32) {
    %c0_i32 = arith.constant 0 : i32
    %c0_i32_0 = arith.constant 0 : i32
    %c0_i32_1 = arith.constant 0 : i32
    return %c0_i32, %c0_i32_0 : i32, i32
  }
  func.func @transform_4(%arg0: i32) -> (i32, i32) {
    %c0_i32 = arith.constant 0 : i32
    %c0_i32_0 = arith.constant 0 : i32
    %c0_i32_1 = arith.constant 0 : i32
    return %c0_i32, %c0_i32_0 : i32, i32
  }
  func.func @transform_5(%arg0: i32) -> (i32, i32) {
    %c0_i32 = arith.constant 0 : i32
    %c0_i32_0 = arith.constant 0 : i32
    %c0_i32_1 = arith.constant 0 : i32
    return %c0_i32, %c0_i32_0 : i32, i32
  }
  func.func @transform_6(%arg0: i32) -> (i32, i32, i32) {
    %c0_i32 = arith.constant 0 : i32
    %c0_i32_0 = arith.constant 0 : i32
    %c0_i32_1 = arith.constant 0 : i32
    return %arg0, %c0_i32, %c0_i32_0 : i32, i32, i32
  }
}

</mosaic_0001>

<llo_original>
// kernel: tpu_custom_call.1
$region0: #{tpu_custom_call.1}
  #allocation0 [shape = 'u32[]', space=smem, size = 0x4, offset = 0x4, fixed_abs, tag = 'smem constant byte address 0x4 - core index']
  #allocation1 [shape = 'u32[144,128]{1,0:T(1,128)}', space=vmem, size = 0x12000, scoped, tag = 'internal scratch']
  #allocation2 [shape = 'f32[18,18,24]{2,1,0:T(8,128)}', space=vmem, size = 0x36000, scoped, tag = 'scratch operand']
  %s0 = inlined_call_operand.hbm [shape: f32[2,4,256], index: 0, kind: input, shape index: {}]
  %s1 = inlined_call_operand.hbm [shape: f32[4,24], index: 1, kind: input, shape index: {}]
  %s2 = inlined_call_operand.vmem [shape: f32[3,3,24], index: 2, kind: input, shape index: {}]
  %s3 = inlined_call_operand.vmem [shape: f32[4,24], index: 3, kind: input, shape index: {}]
  %s4 = inlined_call_operand.vmem [shape: f32[2,24], index: 4, kind: input, shape index: {}]
  %s5 = inlined_call_operand.vmem [shape: f32[4,1], index: 5, kind: input, shape index: {}]
  %s6 = inlined_call_operand.hbm [shape: f32[2,4,256], index: 6, kind: output, shape index: {}]
  %s7 = sld [smem:[#allocation0]]
  $region65: #{tpu_custom_call.1} parent=0
    _
  %s9 = ssub.s32 1, %s7
  %s10 = scalar_select 0, %s9, %s7
  $region1: #{tpu_custom_call.1} parent=0
    #allocation3 [shape = 'u8[8192]{0}', space=vmem, size = 0x2000, scoped, tag = 'input window, operand 0']
    #allocation4 [shape = 's32[2]{0}', space=sflag, size = 0x8, scoped, tag = 'scoped memory for tpu_custom_call.1']
    #allocation5 [shape = 's32[2]{0}', space=sflag, size = 0x8, scoped, tag = 'scoped memory for tpu_custom_call.1']
    #allocation6 [shape = 'u8[2048]{0}', space=vmem, size = 0x800, scoped, tag = 'input window, operand 1, single buffered']
    #allocation7 [shape = 's32[1]{0}', space=sflag, size = 0x4, scoped, tag = 'scoped memory for tpu_custom_call.1']
    #allocation8 [shape = 'u8[8192]{0}', space=vmem, size = 0x2000, scoped, tag = 'output window, operand 0']
    %11 = vsyncpa [#allocation4], 0
    %s12 = scalar_lea.sflag [#allocation4], 1
    %13 = vsyncpa %s12, 0
    %14 = vsyncpa [#allocation7], 0
    %15 = vsyncpa [#allocation5], 0
    %s16 = scalar_lea.sflag [#allocation5], 1
    %17 = vsyncpa %s16, 0
    loop: start=0, step=1, limit=4
    $region2: #{tpu_custom_call.1} parent=1 // loop_pre_header
      _
    $region3: #{tpu_custom_call.1} parent=1 // loop_header
      %s19 = sphi 0, %s23
      %p20 = scmp.ge.s32.totalorder %s19, 4
      %s29 = sphi 0, %s31
      %s32 = sphi 0, %s29
      %s33 = sphi 0, %s32
      %s49 = sphi 0, %s33
      %s53 = sphi 0, %s53
      %s55 = sphi 0, %s53
      %s56 = sphi 0, %s55
      %s70 = sphi 0, %s56
      %s74 = sphi 0, %s74
      %s76 = sphi 0, %s74
      %s77 = sphi 0, %s76
      %s91 = sphi 0, %s77
      %s95 = sphi 0, %s95
      %s97 = sphi 0, %s95
      %s98 = sphi 0, %s97
      %s112 = sphi 0, %s98
      %s116 = sphi 0, %s116
      %s118 = sphi 0, %s116
      %s119 = sphi 0, %s118
      %s133 = sphi 0, %s119
      %s137 = sphi 0, %s137
      %s139 = sphi 0, %s137
      %s140 = sphi 0, %s139
      %s154 = sphi 0, %s140
      %s160 = sphi 0, %s162
      %s163 = sphi 0, %s160
      %s164 = sphi 0, %s163
      %s180 = sphi 0, %s164
    $region4: #{tpu_custom_call.1} parent=1 // loop_header_branch
      %22 = sbr.rel (%p20) target = $region8
    $region5: #{tpu_custom_call.1} parent=1 // loop_body
      %s24 = ssub.s32 %s19, 1
      %s25 = ssub.s32 %s19, 2
      %s26 = sadd.s32 %s19, 1
      %s27 = ssub.s32 %s19, %s26
      %p28 = scmp.eq.s32.totalorder %s27, 0
      %s30 = sadd.s32 %s29, 1
      %s31 = scalar_select %p28, %s29, %s30
      %p34 = pneg %p28
      %p35 = scmp.eq.s32.totalorder %s19, 1
      %p36 = por %p34, %p35
      %p37 = scmp.ne.s32.totalorder %s29, %s32
      %p38 = scmp.eq.s32.totalorder %s19, 0
      %p39 = por %p37, %p38
      %p40 = scmp.ne.s32.totalorder %s29, %s32
      %p41 = scmp.eq.s32.totalorder %s24, 1
      %p42 = por %p40, %p41
      %p43 = scmp.ne.s32.totalorder %s32, %s33
      %p44 = scmp.eq.s32.totalorder %s24, 0
      %p45 = por %p43, %p44
      %p46 = scmp.ne.s32.totalorder %s32, %s33
      %p47 = scmp.eq.s32.totalorder %s25, 1
      %p48 = por %p46, %p47
      %p50 = scmp.ne.s32.totalorder %s33, %s49
      %p51 = scmp.eq.s32.totalorder %s25, 0
      %p52 = por %p50, %p51
      %s54 = sadd.s32 %s53, 1
      %p57 = scmp.eq.s32.totalorder %s19, 1
      %p58 = scmp.ne.s32.totalorder %s53, %s55
      %p59 = scmp.eq.s32.totalorder %s19, 0
      %p60 = por %p58, %p59
      %p61 = scmp.ne.s32.totalorder %s53, %s55
      %p62 = scmp.eq.s32.totalorder %s24, 1
      %p63 = por %p61, %p62
      %p64 = scmp.ne.s32.totalorder %s55, %s56
      %p65 = scmp.eq.s32.totalorder %s24, 0
      %p66 = por %p64, %p65
      %p67 = scmp.ne.s32.totalorder %s55, %s56
      %p68 = scmp.eq.s32.totalorder %s25, 1
      %p69 = por %p67, %p68
      %p71 = scmp.ne.s32.totalorder %s56, %s70
      %p72 = scmp.eq.s32.totalorder %s25, 0
      %p73 = por %p71, %p72
      %s75 = sadd.s32 %s74, 1
      %p78 = scmp.eq.s32.totalorder %s19, 1
      %p79 = scmp.ne.s32.totalorder %s74, %s76
      %p80 = scmp.eq.s32.totalorder %s19, 0
      %p81 = por %p79, %p80
      %p82 = scmp.ne.s32.totalorder %s74, %s76
      %p83 = scmp.eq.s32.totalorder %s24, 1
      %p84 = por %p82, %p83
      %p85 = scmp.ne.s32.totalorder %s76, %s77
      %p86 = scmp.eq.s32.totalorder %s24, 0
      %p87 = por %p85, %p86
      %p88 = scmp.ne.s32.totalorder %s76, %s77
      %p89 = scmp.eq.s32.totalorder %s25, 1
      %p90 = por %p88, %p89
      %p92 = scmp.ne.s32.totalorder %s77, %s91
      %p93 = scmp.eq.s32.totalorder %s25, 0
      %p94 = por %p92, %p93
      %s96 = sadd.s32 %s95, 1
      %p99 = scmp.eq.s32.totalorder %s19, 1
      %p100 = scmp.ne.s32.totalorder %s95, %s97
      %p101 = scmp.eq.s32.totalorder %s19, 0
      %p102 = por %p100, %p101
      %p103 = scmp.ne.s32.totalorder %s95, %s97
      %p104 = scmp.eq.s32.totalorder %s24, 1
      %p105 = por %p103, %p104
      %p106 = scmp.ne.s32.totalorder %s97, %s98
      %p107 = scmp.eq.s32.totalorder %s24, 0
      %p108 = por %p106, %p107
      %p109 = scmp.ne.s32.totalorder %s97, %s98
      %p110 = scmp.eq.s32.totalorder %s25, 1
      %p111 = por %p109, %p110
      %p113 = scmp.ne.s32.totalorder %s98, %s112
      %p114 = scmp.eq.s32.totalorder %s25, 0
      %p115 = por %p113, %p114
      %s117 = sadd.s32 %s116, 1
      %p120 = scmp.eq.s32.totalorder %s19, 1
      %p121 = scmp.ne.s32.totalorder %s116, %s118
      %p122 = scmp.eq.s32.totalorder %s19, 0
      %p123 = por %p121, %p122
      %p124 = scmp.ne.s32.totalorder %s116, %s118
      %p125 = scmp.eq.s32.totalorder %s24, 1
      %p126 = por %p124, %p125
      %p127 = scmp.ne.s32.totalorder %s118, %s119
      %p128 = scmp.eq.s32.totalorder %s24, 0
      %p129 = por %p127, %p128
      %p130 = scmp.ne.s32.totalorder %s118, %s119
      %p131 = scmp.eq.s32.totalorder %s25, 1
      %p132 = por %p130, %p131
      %p134 = scmp.ne.s32.totalorder %s119, %s133
      %p135 = scmp.eq.s32.totalorder %s25, 0
      %p136 = por %p134, %p135
      %s138 = sadd.s32 %s137, 1
      %p141 = scmp.eq.s32.totalorder %s19, 1
      %p142 = scmp.ne.s32.totalorder %s137, %s139
      %p143 = scmp.eq.s32.totalorder %s19, 0
      %p144 = por %p142, %p143
      %p145 = scmp.ne.s32.totalorder %s137, %s139
      %p146 = scmp.eq.s32.totalorder %s24, 1
      %p147 = por %p145, %p146
      %p148 = scmp.ne.s32.totalorder %s139, %s140
      %p149 = scmp.eq.s32.totalorder %s24, 0
      %p150 = por %p148, %p149
      %p151 = scmp.ne.s32.totalorder %s139, %s140
      %p152 = scmp.eq.s32.totalorder %s25, 1
      %p153 = por %p151, %p152
      %p155 = scmp.ne.s32.totalorder %s140, %s154
      %p156 = scmp.eq.s32.totalorder %s25, 0
      %p157 = por %p155, %p156
      %s158 = ssub.s32 %s19, %s26
      %p159 = scmp.eq.s32.totalorder %s158, 0
      %s161 = sadd.s32 %s160, 1
      %s162 = scalar_select %p159, %s160, %s161
      %p165 = pneg %p159
      %p166 = scmp.eq.s32.totalorder %s19, 1
      %p167 = por %p165, %p166
      %p168 = scmp.ne.s32.totalorder %s160, %s163
      %p169 = scmp.eq.s32.totalorder %s19, 0
      %p170 = por %p168, %p169
      %p171 = scmp.ne.s32.totalorder %s160, %s163
      %p172 = scmp.eq.s32.totalorder %s24, 1
      %p173 = por %p171, %p172
      %p174 = scmp.ne.s32.totalorder %s163, %s164
      %p175 = scmp.eq.s32.totalorder %s24, 0
      %p176 = por %p174, %p175
      %p177 = scmp.ne.s32.totalorder %s163, %s164
      %p178 = scmp.eq.s32.totalorder %s25, 1
      %p179 = por %p177, %p178
      %p181 = scmp.ne.s32.totalorder %s164, %s180
      %p182 = scmp.eq.s32.totalorder %s25, 0
      %p183 = por %p181, %p182
      %p184 = scmp.le.s32.totalorder 1, %s19
      %p185 = scmp.lt.s32.totalorder %s19, 3
      %p186 = pnand %p184, %p185
      %p187 = pneg %p186
      // Predicated region
      $region9: #{tpu_custom_call.1} parent=5 // pred_check
        _
      $region10: #{tpu_custom_call.1} parent=5 // pred_check_branch
        %189 = sbr.rel (%p186) target = $region12
      $region11: #{tpu_custom_call.1} parent=5 // pred_region
        %s190 = ssub.s32 %s19, 1
        // Predicated region
        $region13: #{tpu_custom_call.1} parent=11 // pred_check
          %p191 = pneg %p66
        $region14: #{tpu_custom_call.1} parent=11 // pred_check_branch
          %193 = sbr.rel (%p191) target = $region16
        $region15: #{tpu_custom_call.1} parent=11 // pred_region
          %s195 = ssub.s32 64, 64
          %196 = vsyncadd [#allocation7], %s195
          %s198 = sshll.u32 [#allocation6], 4
          %s199 = int_to_ptr.vmem [resolvable:$true] %s198
          %201 = dma.hbm_to_vmem [thread:$0]  %s1, 64, %s199, [#allocation7]
        $region16: #{tpu_custom_call.1} parent=11 // pred_fallthru
          _
        // Predicated region
        $region17: #{tpu_custom_call.1} parent=11 // pred_check
          %p202 = pneg %p87
        $region18: #{tpu_custom_call.1} parent=11 // pred_check_branch
          %204 = sbr.rel (%p202) target = $region20
        $region19: #{tpu_custom_call.1} parent=11 // pred_region
          _
        $region20: #{tpu_custom_call.1} parent=11 // pred_fallthru
          _
        // Predicated region
        $region21: #{tpu_custom_call.1} parent=11 // pred_check
          %p205 = pneg %p108
        $region22: #{tpu_custom_call.1} parent=11 // pred_check_branch
          %207 = sbr.rel (%p205) target = $region24
        $region23: #{tpu_custom_call.1} parent=11 // pred_region
          _
        $region24: #{tpu_custom_call.1} parent=11 // pred_fallthru
          _
        // Predicated region
        $region25: #{tpu_custom_call.1} parent=11 // pred_check
          %p208 = pneg %p129
        $region26: #{tpu_custom_call.1} parent=11 // pred_check_branch
          %210 = sbr.rel (%p208) target = $region28
        $region27: #{tpu_custom_call.1} parent=11 // pred_region
          _
        $region28: #{tpu_custom_call.1} parent=11 // pred_fallthru
          _
        // Predicated region
        $region29: #{tpu_custom_call.1} parent=11 // pred_check
          %p211 = pneg %p150
        $region30: #{tpu_custom_call.1} parent=11 // pred_check_branch
          %213 = sbr.rel (%p211) target = $region32
        $region31: #{tpu_custom_call.1} parent=11 // pred_region
          _
        $region32: #{tpu_custom_call.1} parent=11 // pred_fallthru
          _
      $region12: #{tpu_custom_call.1} parent=5 // pred_fallthru
        _
      %p214 = scmp.lt.s32.totalorder %s19, 2
      // Predicated region
      $region33: #{tpu_custom_call.1} parent=5 // pred_check
        %p215 = pneg %p214
      $region34: #{tpu_custom_call.1} parent=5 // pred_check_branch
        %217 = sbr.rel (%p215) target = $region36
      $region35: #{tpu_custom_call.1} parent=5 // pred_region
        // Predicated region
        $region37: #{tpu_custom_call.1} parent=35 // pred_check
          %p218 = pneg %p39
        $region38: #{tpu_custom_call.1} parent=35 // pred_check_branch
          %220 = sbr.rel (%p218) target = $region40
        $region39: #{tpu_custom_call.1} parent=35 // pred_region
          %s221 = sand.u32 %s29, 1
          %s222 = scalar_lea.sflag [#allocation4], %s221
          %s223 = sand.u32 %s29, 1
          %s224 = smul.addr %s223, 8
          %s225 = scalar_lea.vmem [#allocation3], %s224
          %s227 = ssub.s32 128, 128
          %228 = vsyncadd %s222, %s227
          %s229 = smul.addr %s19, 2
          %s230 = smul.addr %s229, 64
          %s231 = scalar_lea.hbm %s0, %s230
          %s233 = sshll.u32 %s225, 4
          %s234 = int_to_ptr.vmem [resolvable:$true] %s233
          %236 = dma.hbm_to_vmem [thread:$0]  %s231, 128, %s234, %s222
        $region40: #{tpu_custom_call.1} parent=35 // pred_fallthru
          _
      $region36: #{tpu_custom_call.1} parent=5 // pred_fallthru
        _
      %p237 = scmp.le.s32.totalorder 1, %s19
      %p238 = scmp.lt.s32.totalorder %s19, 3
      %p239 = pnand %p237, %p238
      %p240 = pneg %p239
      // Predicated region
      $region41: #{tpu_custom_call.1} parent=5 // pred_check
        _
      $region42: #{tpu_custom_call.1} parent=5 // pred_check_branch
        %242 = sbr.rel (%p239) target = $region44
      $region43: #{tpu_custom_call.1} parent=5 // pred_region
        %s243 = ssub.s32 %s19, 1
        %s244 = sand.u32 %s32, 1
        %s245 = scalar_lea.sflag [#allocation4], %s244
        %s246 = sand.u32 %s32, 1
        %s247 = smul.addr %s246, 8
        %s248 = scalar_lea.vmem [#allocation3], %s247
        // Predicated region
        $region45: #{tpu_custom_call.1} parent=43 // pred_check
          %p249 = pneg %p45
        $region46: #{tpu_custom_call.1} parent=43 // pred_check_branch
          %251 = sbr.rel (%p249) target = $region48
        $region47: #{tpu_custom_call.1} parent=43 // pred_region
          %252 = dma.done %s245, 128
        $region48: #{tpu_custom_call.1} parent=43 // pred_fallthru
          _
        // Predicated region
        $region49: #{tpu_custom_call.1} parent=43 // pred_check
          %p253 = pneg %p66
        $region50: #{tpu_custom_call.1} parent=43 // pred_check_branch
          %255 = sbr.rel (%p253) target = $region52
        $region51: #{tpu_custom_call.1} parent=43 // pred_region
          %256 = dma.done [#allocation7], 64
        $region52: #{tpu_custom_call.1} parent=43 // pred_fallthru
          _
        %s257 = sand.u32 %s32, 1
        %s258 = scalar_lea.sflag [#allocation4], %s257
        %s259 = sand.u32 %s32, 1
        %s260 = smul.addr %s259, 8
        %s261 = scalar_lea.vmem [#allocation3], %s260
        %p262 = pneg %p45
        %p263 = pneg %p42
        %p264 = pneg %p66
        %p265 = pneg %p63
        %p266 = pneg %p87
        %p267 = pneg %p84
        %p268 = pneg %p108
        %p269 = pneg %p105
        %p270 = pneg %p129
        %p271 = pneg %p126
        %p272 = pneg %p150
        %p273 = pneg %p147
        %p274 = pneg %p176
        %p275 = pneg %p173
        %s276 = sand.u32 %s163, 1
        %s277 = scalar_lea.sflag [#allocation5], %s276
        %s278 = sand.u32 %s163, 1
        %s279 = smul.addr %s278, 8
        %s280 = scalar_lea.vmem [#allocation8], %s279
        %vm281 = vcmask 195584
        %282 = vst.msk [vmem:[#allocation2] sm:$0xff] %vm281, 0.0
        %283 = vst.msk [vmem:[#allocation2 + $0x8] sm:$0xff] %vm281, 0.0
        %vm284 = vcmask 189440
        %285 = vst.msk [vmem:[#allocation2 + $0x10] sm:$0x3] %vm284, 0.0
        %s286 = scalar_lea.vmem [#allocation2], 408
        %287 = vst.msk [vmem:[%s286] sm:$0xff] %vm281, 0.0
        %288 = vst.msk [vmem:[%s286 + $0x8] sm:$0xff] %vm281, 0.0
        %289 = vst.msk [vmem:[%s286 + $0x10] sm:$0x3] %vm284, 0.0
        %vm290 = vcmask 188416
        %291 = vst.msk [vmem:[#allocation2] sm:$0x1] %vm290, 0.0
        %292 = vst.msk [vmem:[#allocation2 + $0x18] sm:$0x1] %vm290, 0.0
        %293 = vst.msk [vmem:[#allocation2 + $0x30] sm:$0x1] %vm290, 0.0
        %294 = vst.msk [vmem:[#allocation2 + $0x48] sm:$0x1] %vm290, 0.0
        %295 = vst.msk [vmem:[#allocation2 + $0x60] sm:$0x1] %vm290, 0.0
        %296 = vst.msk [vmem:[#allocation2 + $0x78] sm:$0x1] %vm290, 0.0
        %297 = vst.msk [vmem:[#allocation2 + $0x90] sm:$0x1] %vm290, 0.0
        %298 = vst.msk [vmem:[#allocation2 + $0xa8] sm:$0x1] %vm290, 0.0
        %299 = vst.msk [vmem:[#allocation2 + $0xc0] sm:$0x1] %vm290, 0.0
        %300 = vst.msk [vmem:[#allocation2 + $0xd8] sm:$0x1] %vm290, 0.0
        %301 = vst.msk [vmem:[#allocation2 + $0xf0] sm:$0x1] %vm290, 0.0
        %302 = vst.msk [vmem:[#allocation2 + $0x108] sm:$0x1] %vm290, 0.0
        %303 = vst.msk [vmem:[#allocation2 + $0x120] sm:$0x1] %vm290, 0.0
        %304 = vst.msk [vmem:[#allocation2 + $0x138] sm:$0x1] %vm290, 0.0
        %305 = vst.msk [vmem:[#allocation2 + $0x150] sm:$0x1] %vm290, 0.0
        %306 = vst.msk [vmem:[#allocation2 + $0x168] sm:$0x1] %vm290, 0.0
        %307 = vst.msk [vmem:[#allocation2 + $0x180] sm:$0x1] %vm290, 0.0
        %308 = vst.msk [vmem:[#allocation2 + $0x198] sm:$0x1] %vm290, 0.0
        %309 = vst.msk [vmem:[#allocation2 + $0x11] sm:$0x1] %vm290, 0.0
        %310 = vst.msk [vmem:[#allocation2 + $0x29] sm:$0x1] %vm290, 0.0
        %311 = vst.msk [vmem:[#allocation2 + $0x41] sm:$0x1] %vm290, 0.0
        %312 = vst.msk [vmem:[#allocation2 + $0x59] sm:$0x1] %vm290, 0.0
        %313 = vst.msk [vmem:[#allocation2 + $0x71] sm:$0x1] %vm290, 0.0
        %314 = vst.msk [vmem:[#allocation2 + $0x89] sm:$0x1] %vm290, 0.0
        %315 = vst.msk [vmem:[#allocation2 + $0xa1] sm:$0x1] %vm290, 0.0
        %316 = vst.msk [vmem:[#allocation2 + $0xb9] sm:$0x1] %vm290, 0.0
        %317 = vst.msk [vmem:[#allocation2 + $0xd1] sm:$0x1] %vm290, 0.0
        %318 = vst.msk [vmem:[#allocation2 + $0xe9] sm:$0x1] %vm290, 0.0
        %319 = vst.msk [vmem:[#allocation2 + $0x101] sm:$0x1] %vm290, 0.0
        %320 = vst.msk [vmem:[#allocation2 + $0x119] sm:$0x1] %vm290, 0.0
        %321 = vst.msk [vmem:[#allocation2 + $0x131] sm:$0x1] %vm290, 0.0
        %322 = vst.msk [vmem:[#allocation2 + $0x149] sm:$0x1] %vm290, 0.0
        %323 = vst.msk [vmem:[#allocation2 + $0x161] sm:$0x1] %vm290, 0.0
        %324 = vst.msk [vmem:[#allocation2 + $0x179] sm:$0x1] %vm290, 0.0
        %325 = vst.msk [vmem:[#allocation2 + $0x191] sm:$0x1] %vm290, 0.0
        %326 = vst.msk [vmem:[#allocation2 + $0x1a9] sm:$0x1] %vm290, 0.0
        %v327 = vld [vmem:[%s248] sm:$0xff]
        %v328 = vld [vmem:[#allocation6] sm:$0xf]
        %v329 = vld [vmem:[%s4] sm:$0x1]
        %v330 = vlaneseq
        %v331 = vshrl.u32 %v330, 7
        %v332 = vsub.s32 0, %v331
        %v333 = vrot.slane %v329, %v332
        %v335 = vcombine.high %v327, %v327
        %337 = vxpose.xlu0.b32.start [1/16] %v327, 128
        %338 = vxpose.xlu0.b32.cont [2/16] 0.0, 128
        %339 = vxpose.xlu0.b32.cont [3/16] 0.0, 128
        %340 = vxpose.xlu0.b32.cont [4/16] 0.0, 128
        %341 = vxpose.xlu0.b32.cont [5/16] 0.0, 128
        %342 = vxpose.xlu0.b32.cont [6/16] 0.0, 128
        %343 = vxpose.xlu0.b32.cont [7/16] 0.0, 128
        %344 = vxpose.xlu0.b32.cont [8/16] 0.0, 128
        %345 = vxpose.xlu0.b32.cont [9/16] 0.0, 128
        %346 = vxpose.xlu0.b32.cont [10/16] 0.0, 128
        %347 = vxpose.xlu0.b32.cont [11/16] 0.0, 128
        %348 = vxpose.xlu0.b32.cont [12/16] 0.0, 128
        %349 = vxpose.xlu0.b32.cont [13/16] 0.0, 128
        %350 = vxpose.xlu0.b32.cont [14/16] 0.0, 128
        %351 = vxpose.xlu0.b32.cont [15/16] 0.0, 128
        %352 = vxpose.xlu0.b32.end [16/16] 0.0, 128
        %v353 = vpop.trf.xlu0
        %v354 = vpop.trf.xlu0
        %v355 = vpop.trf.xlu0
        %v356 = vpop.trf.xlu0
        %v357 = vpop.trf.xlu0
        %v358 = vpop.trf.xlu0
        %v359 = vpop.trf.xlu0
        %v360 = vpop.trf.xlu0
        %v361 = vpop.trf.xlu0
        %v362 = vpop.trf.xlu0
        %v363 = vpop.trf.xlu0
        %v364 = vpop.trf.xlu0
        %v365 = vpop.trf.xlu0
        %v366 = vpop.trf.xlu0
        %v367 = vpop.trf.xlu0
        %v368 = vpop.trf.xlu0
        %369 = vxpose.xlu0.b32.start [1/16] %v335, 128
        %370 = vxpose.xlu0.b32.cont [2/16] 0.0, 128
        %371 = vxpose.xlu0.b32.cont [3/16] 0.0, 128
        %372 = vxpose.xlu0.b32.cont [4/16] 0.0, 128
        %373 = vxpose.xlu0.b32.cont [5/16] 0.0, 128
        %374 = vxpose.xlu0.b32.cont [6/16] 0.0, 128
        %375 = vxpose.xlu0.b32.cont [7/16] 0.0, 128
        %376 = vxpose.xlu0.b32.cont [8/16] 0.0, 128
        %377 = vxpose.xlu0.b32.cont [9/16] 0.0, 128
        %378 = vxpose.xlu0.b32.cont [10/16] 0.0, 128
        %379 = vxpose.xlu0.b32.cont [11/16] 0.0, 128
        %380 = vxpose.xlu0.b32.cont [12/16] 0.0, 128
        %381 = vxpose.xlu0.b32.cont [13/16] 0.0, 128
        %382 = vxpose.xlu0.b32.cont [14/16] 0.0, 128
        %383 = vxpose.xlu0.b32.cont [15/16] 0.0, 128
        %384 = vxpose.xlu0.b32.end [16/16] 0.0, 128
        %v385 = vpop.trf.xlu0
        %v386 = vpop.trf.xlu0
        %v387 = vpop.trf.xlu0
        %v388 = vpop.trf.xlu0
        %v389 = vpop.trf.xlu0
        %v390 = vpop.trf.xlu0
        %v391 = vpop.trf.xlu0
        %v392 = vpop.trf.xlu0
        %v393 = vpop.trf.xlu0
        %v394 = vpop.trf.xlu0
        %v395 = vpop.trf.xlu0
        %v396 = vpop.trf.xlu0
        %v397 = vpop.trf.xlu0
        %v398 = vpop.trf.xlu0
        %v399 = vpop.trf.xlu0
        %v400 = vpop.trf.xlu0
        %vm401 = vcmask 31744
        %v403 = vsel %vm401, %v353, 0
        %v406 = vsel %vm401, %v354, 0
        %v409 = vsel %vm401, %v355, 0
        %v412 = vsel %vm401, %v356, 0
        %v415 = vsel %vm401, %v357, 0
        %v418 = vsel %vm401, %v358, 0
        %v421 = vsel %vm401, %v359, 0
        %v424 = vsel %vm401, %v360, 0
        %v427 = vsel %vm401, %v361, 0
        %v430 = vsel %vm401, %v362, 0
        %v433 = vsel %vm401, %v363, 0
        %v436 = vsel %vm401, %v364, 0
        %v439 = vsel %vm401, %v365, 0
        %v442 = vsel %vm401, %v366, 0
        %v445 = vsel %vm401, %v367, 0
        %v448 = vsel %vm401, %v368, 0
        %v451 = vsel %vm401, %v385, 0
        %v454 = vsel %vm401, %v386, 0
        %v457 = vsel %vm401, %v387, 0
        %v460 = vsel %vm401, %v388, 0
        %v463 = vsel %vm401, %v389, 0
        %v466 = vsel %vm401, %v390, 0
        %v469 = vsel %vm401, %v391, 0
        %v472 = vsel %vm401, %v392, 0
        %v475 = vsel %vm401, %v393, 0
        %v478 = vsel %vm401, %v394, 0
        %v481 = vsel %vm401, %v395, 0
        %v484 = vsel %vm401, %v396, 0
        %v487 = vsel %vm401, %v397, 0
        %v490 = vsel %vm401, %v398, 0
        %v493 = vsel %vm401, %v399, 0
        %v496 = vsel %vm401, %v400, 0
        %vm498 = vcmask 1043456
        %v500 = vsel %vm498, %v328, 0
        %502 = vmatprep.subr.mxu0 0.0
        %503 = vmatpush1.msra.mxu0 %v500
        %504 = vmatprep.subr.mxu0 0.0
        %505 = vmatpush1.msra.mxu0 0.0
        %506 = vmatprep.subr.mxu0 0.0
        %507 = vmatpush1.msra.mxu0 0.0
        %508 = vmatprep.subr.mxu0 0.0
        %509 = vmatpush1.msra.mxu0 0.0
        %510 = vmatprep.subr.mxu0 0.0
        %511 = vmatpush1.msra.mxu0 0.0
        %512 = vmatprep.subr.mxu0 0.0
        %513 = vmatpush1.msra.mxu0 0.0
        %514 = vmatprep.subr.mxu0 0.0
        %515 = vmatpush1.msra.mxu0 0.0
        %516 = vmatprep.subr.mxu0 0.0
        %517 = vmatpush1.msra.mxu0 0.0
        %518 = vmatprep.subr.mxu0 0.0
        %519 = vmatpush1.msra.mxu0 0.0
        %520 = vmatprep.subr.mxu0 0.0
        %521 = vmatpush1.msra.mxu0 0.0
        %522 = vmatprep.subr.mxu0 0.0
        %523 = vmatpush1.msra.mxu0 0.0
        %524 = vmatprep.subr.mxu0 0.0
        %525 = vmatpush1.msra.mxu0 0.0
        %526 = vmatprep.subr.mxu0 0.0
        %527 = vmatpush1.msra.mxu0 0.0
        %528 = vmatprep.subr.mxu0 0.0
        %529 = vmatpush1.msra.mxu0 0.0
        %530 = vmatprep.subr.mxu0 0.0
        %531 = vmatpush1.msra.mxu0 0.0
        %532 = vmatprep.subr.mxu0 0.0
        %533 = vmatpush1.msra.mxu0 0.0
        %534 = vmatprep.subr.mxu0 0.0
        %535 = vmatpush1.msra.mxu0 0.0
        %536 = vmatprep.subr.mxu0 0.0
        %537 = vmatpush1.msra.mxu0 0.0
        %538 = vmatprep.subr.mxu0 0.0
        %539 = vmatpush1.msra.mxu0 0.0
        %540 = vmatprep.subr.mxu0 0.0
        %541 = vmatpush1.msra.mxu0 0.0
        %542 = vmatprep.subr.mxu0 0.0
        %543 = vmatpush1.msra.mxu0 0.0
        %544 = vmatprep.subr.mxu0 0.0
        %545 = vmatpush1.msra.mxu0 0.0
        %546 = vmatprep.subr.mxu0 0.0
        %547 = vmatpush1.msra.mxu0 0.0
        %548 = vmatprep.subr.mxu0 0.0
        %549 = vmatpush1.msra.mxu0 0.0
        %550 = vmatprep.subr.mxu0 0.0
        %551 = vmatpush1.msra.mxu0 0.0
        %552 = vmatprep.subr.mxu0 0.0
        %553 = vmatpush1.msra.mxu0 0.0
        %554 = vmatprep.subr.mxu0 0.0
        %555 = vmatpush1.msra.mxu0 0.0
        %556 = vmatprep.subr.mxu0 0.0
        %557 = vmatpush1.msra.mxu0 0.0
        %558 = vmatprep.subr.mxu0 0.0
        %559 = vmatpush1.msra.mxu0 0.0
        %560 = vmatprep.subr.mxu0 0.0
        %561 = vmatpush1.msra.mxu0 0.0
        %562 = vmatprep.subr.mxu0 0.0
        %563 = vmatpush1.msra.mxu0 0.0
        %564 = vmatprep.subr.mxu0 0.0
        %565 = vmatpush1.msra.mxu0 0.0
        %566 = vmatprep.mubr.f32.mxu0 0.0
        %567 = vmatmul.mubr.f32.gmra.mrb[0].mxu0 %v403
        %v568 = vpop.f32.mrb[0].mxu0
        %v569 = vadd.f32 %v333, %v568
        %v570 = vpop.f32.mrb[0].mxu0
        %571 = vmatprep.mubr.f32.mxu0 0.0
        %572 = vmatmul.mubr.f32.gmra.mrb[0].mxu0 %v406
        %v573 = vpop.f32.mrb[0].mxu0
        %v574 = vadd.f32 %v333, %v573
        %v575 = vpop.f32.mrb[0].mxu0
        %576 = vmatprep.mubr.f32.mxu0 0.0
        %577 = vmatmul.mubr.f32.gmra.mrb[0].mxu0 %v409
        %v578 = vpop.f32.mrb[0].mxu0
        %v579 = vadd.f32 %v333, %v578
        %v580 = vpop.f32.mrb[0].mxu0
        %581 = vmatprep.mubr.f32.mxu0 0.0
        %582 = vmatmul.mubr.f32.gmra.mrb[0].mxu0 %v412
        %v583 = vpop.f32.mrb[0].mxu0
        %v584 = vadd.f32 %v333, %v583
        %v585 = vpop.f32.mrb[0].mxu0
        %586 = vmatprep.mubr.f32.mxu0 0.0
        %587 = vmatmul.mubr.f32.gmra.mrb[0].mxu0 %v415
        %v588 = vpop.f32.mrb[0].mxu0
        %v589 = vadd.f32 %v333, %v588
        %v590 = vpop.f32.mrb[0].mxu0
        %591 = vmatprep.mubr.f32.mxu0 0.0
        %592 = vmatmul.mubr.f32.gmra.mrb[0].mxu0 %v418
        %v593 = vpop.f32.mrb[0].mxu0
        %v594 = vadd.f32 %v333, %v593
        %v595 = vpop.f32.mrb[0].mxu0
        %596 = vmatprep.mubr.f32.mxu0 0.0
        %597 = vmatmul.mubr.f32.gmra.mrb[0].mxu0 %v421
        %v598 = vpop.f32.mrb[0].mxu0
        %v599 = vadd.f32 %v333, %v598
        %v600 = vpop.f32.mrb[0].mxu0
        %601 = vmatprep.mubr.f32.mxu0 0.0
        %602 = vmatmul.mubr.f32.gmra.mrb[0].mxu0 %v424
        %v603 = vpop.f32.mrb[0].mxu0
        %v604 = vadd.f32 %v333, %v603
        %v605 = vpop.f32.mrb[0].mxu0
        %606 = vmatprep.mubr.f32.mxu0 0.0
        %607 = vmatmul.mubr.f32.gmra.mrb[0].mxu0 %v427
        %v608 = vpop.f32.mrb[0].mxu0
        %v609 = vadd.f32 %v333, %v608
        %v610 = vpop.f32.mrb[0].mxu0
        %611 = vmatprep.mubr.f32.mxu0 0.0
        %612 = vmatmul.mubr.f32.gmra.mrb[0].mxu0 %v430
        %v613 = vpop.f32.mrb[0].mxu0
        %v614 = vadd.f32 %v333, %v613
        %v615 = vpop.f32.mrb[0].mxu0
        %616 = vmatprep.mubr.f32.mxu0 0.0
        %617 = vmatmul.mubr.f32.gmra.mrb[0].mxu0 %v433
        %v618 = vpop.f32.mrb[0].mxu0
        %v619 = vadd.f32 %v333, %v618
        %v620 = vpop.f32.mrb[0].mxu0
        %621 = vmatprep.mubr.f32.mxu0 0.0
        %622 = vmatmul.mubr.f32.gmra.mrb[0].mxu0 %v436
        %v623 = vpop.f32.mrb[0].mxu0
        %v624 = vadd.f32 %v333, %v623
        %v625 = vpop.f32.mrb[0].mxu0
        %626 = vmatprep.mubr.f32.mxu0 0.0
        %627 = vmatmul.mubr.f32.gmra.mrb[0].mxu0 %v439
        %v628 = vpop.f32.mrb[0].mxu0
        %v629 = vadd.f32 %v333, %v628
        %v630 = vpop.f32.mrb[0].mxu0
        %631 = vmatprep.mubr.f32.mxu0 0.0
        %632 = vmatmul.mubr.f32.gmra.mrb[0].mxu0 %v442
        %v633 = vpop.f32.mrb[0].mxu0
        %v634 = vadd.f32 %v333, %v633
        %v635 = vpop.f32.mrb[0].mxu0
        %636 = vmatprep.mubr.f32.mxu0 0.0
        %637 = vmatmul.mubr.f32.gmra.mrb[0].mxu0 %v445
        %v638 = vpop.f32.mrb[0].mxu0
        %v639 = vadd.f32 %v333, %v638
        %v640 = vpop.f32.mrb[0].mxu0
        %641 = vmatprep.mubr.f32.mxu0 0.0
        %642 = vmatmul.mubr.f32.gmra.mrb[0].mxu0 %v448
        %v643 = vpop.f32.mrb[0].mxu0
        %v644 = vadd.f32 %v333, %v643
        %v645 = vpop.f32.mrb[0].mxu0
        %646 = vmatprep.mubr.f32.mxu0 0.0
        %647 = vmatmul.mubr.f32.gmra.mrb[0].mxu0 %v451
        %v648 = vpop.f32.mrb[0].mxu0
        %v649 = vadd.f32 %v333, %v648
        %v650 = vpop.f32.mrb[0].mxu0
        %651 = vmatprep.mubr.f32.mxu0 0.0
        %652 = vmatmul.mubr.f32.gmra.mrb[0].mxu0 %v454
        %v653 = vpop.f32.mrb[0].mxu0
        %v654 = vadd.f32 %v333, %v653
        %v655 = vpop.f32.mrb[0].mxu0
        %656 = vmatprep.mubr.f32.mxu0 0.0
        %657 = vmatmul.mubr.f32.gmra.mrb[0].mxu0 %v457
        %v658 = vpop.f32.mrb[0].mxu0
        %v659 = vadd.f32 %v333, %v658
        %v660 = vpop.f32.mrb[0].mxu0
        %661 = vmatprep.mubr.f32.mxu0 0.0
        %662 = vmatmul.mubr.f32.gmra.mrb[0].mxu0 %v460
        %v663 = vpop.f32.mrb[0].mxu0
        %v664 = vadd.f32 %v333, %v663
        %v665 = vpop.f32.mrb[0].mxu0
        %666 = vmatprep.mubr.f32.mxu0 0.0
        %667 = vmatmul.mubr.f32.gmra.mrb[0].mxu0 %v463
        %v668 = vpop.f32.mrb[0].mxu0
        %v669 = vadd.f32 %v333, %v668
        %v670 = vpop.f32.mrb[0].mxu0
        %671 = vmatprep.mubr.f32.mxu0 0.0
        %672 = vmatmul.mubr.f32.gmra.mrb[0].mxu0 %v466
        %v673 = vpop.f32.mrb[0].mxu0
        %v674 = vadd.f32 %v333, %v673
        %v675 = vpop.f32.mrb[0].mxu0
        %676 = vmatprep.mubr.f32.mxu0 0.0
        %677 = vmatmul.mubr.f32.gmra.mrb[0].mxu0 %v469
        %v678 = vpop.f32.mrb[0].mxu0
        %v679 = vadd.f32 %v333, %v678
        %v680 = vpop.f32.mrb[0].mxu0
        %681 = vmatprep.mubr.f32.mxu0 0.0
        %682 = vmatmul.mubr.f32.gmra.mrb[0].mxu0 %v472
        %v683 = vpop.f32.mrb[0].mxu0
        %v684 = vadd.f32 %v333, %v683
        %v685 = vpop.f32.mrb[0].mxu0
        %686 = vmatprep.mubr.f32.mxu0 0.0
        %687 = vmatmul.mubr.f32.gmra.mrb[0].mxu0 %v475
        %v688 = vpop.f32.mrb[0].mxu0
        %v689 = vadd.f32 %v333, %v688
        %v690 = vpop.f32.mrb[0].mxu0
        %691 = vmatprep.mubr.f32.mxu0 0.0
        %692 = vmatmul.mubr.f32.gmra.mrb[0].mxu0 %v478
        %v693 = vpop.f32.mrb[0].mxu0
        %v694 = vadd.f32 %v333, %v693
        %v695 = vpop.f32.mrb[0].mxu0
        %696 = vmatprep.mubr.f32.mxu0 0.0
        %697 = vmatmul.mubr.f32.gmra.mrb[0].mxu0 %v481
        %v698 = vpop.f32.mrb[0].mxu0
        %v699 = vadd.f32 %v333, %v698
        %v700 = vpop.f32.mrb[0].mxu0
        %701 = vmatprep.mubr.f32.mxu0 0.0
        %702 = vmatmul.mubr.f32.gmra.mrb[0].mxu0 %v484
        %v703 = vpop.f32.mrb[0].mxu0
        %v704 = vadd.f32 %v333, %v703
        %v705 = vpop.f32.mrb[0].mxu0
        %706 = vmatprep.mubr.f32.mxu0 0.0
        %707 = vmatmul.mubr.f32.gmra.mrb[0].mxu0 %v487
        %v708 = vpop.f32.mrb[0].mxu0
        %v709 = vadd.f32 %v333, %v708
        %v710 = vpop.f32.mrb[0].mxu0
        %711 = vmatprep.mubr.f32.mxu0 0.0
        %712 = vmatmul.mubr.f32.gmra.mrb[0].mxu0 %v490
        %v713 = vpop.f32.mrb[0].mxu0
        %v714 = vadd.f32 %v333, %v713
        %v715 = vpop.f32.mrb[0].mxu0
        %716 = vmatprep.mubr.f32.mxu0 0.0
        %717 = vmatmul.mubr.f32.gmra.mrb[0].mxu0 %v493
        %v718 = vpop.f32.mrb[0].mxu0
        %v719 = vadd.f32 %v333, %v718
        %v720 = vpop.f32.mrb[0].mxu0
        %721 = vmatprep.mubr.f32.mxu0 0.0
        %722 = vmatmul.mubr.f32.gmra.mrb[0].mxu0 %v496
        %v723 = vpop.f32.mrb[0].mxu0
        %v724 = vadd.f32 %v333, %v723
        %v725 = vpop.f32.mrb[0].mxu0
        %726 = vdwg.mxu0
        %v727 = vmax.f32 %v569, 0.0
        %v728 = vmax.f32 %v574, 0.0
        %v729 = vmax.f32 %v579, 0.0
        %v730 = vmax.f32 %v584, 0.0
        %v731 = vmax.f32 %v589, 0.0
        %v732 = vmax.f32 %v594, 0.0
        %v733 = vmax.f32 %v599, 0.0
        %v734 = vmax.f32 %v604, 0.0
        %v735 = vmax.f32 %v609, 0.0
        %v736 = vmax.f32 %v614, 0.0
        %v737 = vmax.f32 %v619, 0.0
        %v738 = vmax.f32 %v624, 0.0
        %v739 = vmax.f32 %v629, 0.0
        %v740 = vmax.f32 %v634, 0.0
        %v741 = vmax.f32 %v639, 0.0
        %v742 = vmax.f32 %v644, 0.0
        %v743 = vmax.f32 %v649, 0.0
        %v744 = vmax.f32 %v654, 0.0
        %v745 = vmax.f32 %v659, 0.0
        %v746 = vmax.f32 %v664, 0.0
        %v747 = vmax.f32 %v669, 0.0
        %v748 = vmax.f32 %v674, 0.0
        %v749 = vmax.f32 %v679, 0.0
        %v750 = vmax.f32 %v684, 0.0
        %v751 = vmax.f32 %v689, 0.0
        %v752 = vmax.f32 %v694, 0.0
        %v753 = vmax.f32 %v699, 0.0
        %v754 = vmax.f32 %v704, 0.0
        %v755 = vmax.f32 %v709, 0.0
        %v756 = vmax.f32 %v714, 0.0
        %v757 = vmax.f32 %v719, 0.0
        %v758 = vmax.f32 %v724, 0.0
        %v759 = vmin.f32 %v727, 6.0
        %v760 = vmin.f32 %v728, 6.0
        %v761 = vmin.f32 %v729, 6.0
        %v762 = vmin.f32 %v730, 6.0
        %v763 = vmin.f32 %v731, 6.0
        %v764 = vmin.f32 %v732, 6.0
        %v765 = vmin.f32 %v733, 6.0
        %v766 = vmin.f32 %v734, 6.0
        %v767 = vmin.f32 %v735, 6.0
        %v768 = vmin.f32 %v736, 6.0
        %v769 = vmin.f32 %v737, 6.0
        %v770 = vmin.f32 %v738, 6.0
        %v771 = vmin.f32 %v739, 6.0
        %v772 = vmin.f32 %v740, 6.0
        %v773 = vmin.f32 %v741, 6.0
        %v774 = vmin.f32 %v742, 6.0
        %v775 = vmin.f32 %v743, 6.0
        %v776 = vmin.f32 %v744, 6.0
        %v777 = vmin.f32 %v745, 6.0
        %v778 = vmin.f32 %v746, 6.0
        %v779 = vmin.f32 %v747, 6.0
        %v780 = vmin.f32 %v748, 6.0
        %v781 = vmin.f32 %v749, 6.0
        %v782 = vmin.f32 %v750, 6.0
        %v783 = vmin.f32 %v751, 6.0
        %v784 = vmin.f32 %v752, 6.0
        %v785 = vmin.f32 %v753, 6.0
        %v786 = vmin.f32 %v754, 6.0
        %v787 = vmin.f32 %v755, 6.0
        %v788 = vmin.f32 %v756, 6.0
        %v789 = vmin.f32 %v757, 6.0
        %v790 = vmin.f32 %v758, 6.0
        %s791 = scalar_lea.vmem [#allocation2], 24
        %792 = vst.msk [vmem:[%s791 + $0x1] sm:$0xff] %vm281, %v759
        %793 = vst.msk [vmem:[%s791 + $0x9] sm:$0xff] %vm281, %v760
        %794 = vst.msk [vmem:[%s791 + $0x19] sm:$0xff] %vm281, %v761
        %795 = vst.msk [vmem:[%s791 + $0x21] sm:$0xff] %vm281, %v762
        %796 = vst.msk [vmem:[%s791 + $0x31] sm:$0xff] %vm281, %v763
        %797 = vst.msk [vmem:[%s791 + $0x39] sm:$0xff] %vm281, %v764
        %798 = vst.msk [vmem:[%s791 + $0x49] sm:$0xff] %vm281, %v765
        %799 = vst.msk [vmem:[%s791 + $0x51] sm:$0xff] %vm281, %v766
        %800 = vst.msk [vmem:[%s791 + $0x61] sm:$0xff] %vm281, %v767
        %801 = vst.msk [vmem:[%s791 + $0x69] sm:$0xff] %vm281, %v768
        %802 = vst.msk [vmem:[%s791 + $0x79] sm:$0xff] %vm281, %v769
        %803 = vst.msk [vmem:[%s791 + $0x81] sm:$0xff] %vm281, %v770
        %804 = vst.msk [vmem:[%s791 + $0x91] sm:$0xff] %vm281, %v771
        %805 = vst.msk [vmem:[%s791 + $0x99] sm:$0xff] %vm281, %v772
        %806 = vst.msk [vmem:[%s791 + $0xa9] sm:$0xff] %vm281, %v773
        %807 = vst.msk [vmem:[%s791 + $0xb1] sm:$0xff] %vm281, %v774
        %808 = vst.msk [vmem:[%s791 + $0xc1] sm:$0xff] %vm281, %v775
        %809 = vst.msk [vmem:[%s791 + $0xc9] sm:$0xff] %vm281, %v776
        %810 = vst.msk [vmem:[%s791 + $0xd9] sm:$0xff] %vm281, %v777
        %811 = vst.msk [vmem:[%s791 + $0xe1] sm:$0xff] %vm281, %v778
        %812 = vst.msk [vmem:[%s791 + $0xf1] sm:$0xff] %vm281, %v779
        %813 = vst.msk [vmem:[%s791 + $0xf9] sm:$0xff] %vm281, %v780
        %814 = vst.msk [vmem:[%s791 + $0x109] sm:$0xff] %vm281, %v781
        %815 = vst.msk [vmem:[%s791 + $0x111] sm:$0xff] %vm281, %v782
        %816 = vst.msk [vmem:[%s791 + $0x121] sm:$0xff] %vm281, %v783
        %817 = vst.msk [vmem:[%s791 + $0x129] sm:$0xff] %vm281, %v784
        %818 = vst.msk [vmem:[%s791 + $0x139] sm:$0xff] %vm281, %v785
        %819 = vst.msk [vmem:[%s791 + $0x141] sm:$0xff] %vm281, %v786
        %820 = vst.msk [vmem:[%s791 + $0x151] sm:$0xff] %vm281, %v787
        %821 = vst.msk [vmem:[%s791 + $0x159] sm:$0xff] %vm281, %v788
        %822 = vst.msk [vmem:[%s791 + $0x169] sm:$0xff] %vm281, %v789
        %823 = vst.msk [vmem:[%s791 + $0x171] sm:$0xff] %vm281, %v790
        %v824 = vld [vmem:[%s2] sm:$0x7]
        %v825 = vld [vmem:[%s2 + $0x4] sm:$0x7]
        %v826 = vld [vmem:[%s2 + $0x8] sm:$0x7]
        %v827 = vld [vmem:[#allocation2] sm:$0xff]
        %v828 = vld [vmem:[#allocation2 + $0x8] sm:$0xff]
        %v829 = vld [vmem:[#allocation2 + $0x18] sm:$0xff]
        %v830 = vld [vmem:[#allocation2 + $0x20] sm:$0xff]
        %v831 = vld [vmem:[#allocation2 + $0x30] sm:$0xff]
        %v832 = vld [vmem:[#allocation2 + $0x38] sm:$0xff]
        %v833 = vld [vmem:[#allocation2 + $0x48] sm:$0xff]
        %v834 = vld [vmem:[#allocation2 + $0x50] sm:$0xff]
        %v835 = vld [vmem:[#allocation2 + $0x60] sm:$0xff]
        %v836 = vld [vmem:[#allocation2 + $0x68] sm:$0xff]
        %v837 = vld [vmem:[#allocation2 + $0x78] sm:$0xff]
        %v838 = vld [vmem:[#allocation2 + $0x80] sm:$0xff]
        %v839 = vld [vmem:[#allocation2 + $0x90] sm:$0xff]
        %v840 = vld [vmem:[#allocation2 + $0x98] sm:$0xff]
        %v841 = vld [vmem:[#allocation2 + $0xa8] sm:$0xff]
        %v842 = vld [vmem:[#allocation2 + $0xb0] sm:$0xff]
        %v843 = vld [vmem:[#allocation2 + $0xc0] sm:$0xff]
        %v844 = vld [vmem:[#allocation2 + $0xc8] sm:$0xff]
        %v845 = vld [vmem:[#allocation2 + $0xd8] sm:$0xff]
        %v846 = vld [vmem:[#allocation2 + $0xe0] sm:$0xff]
        %v847 = vld [vmem:[#allocation2 + $0xf0] sm:$0xff]
        %v848 = vld [vmem:[#allocation2 + $0xf8] sm:$0xff]
        %v849 = vld [vmem:[#allocation2 + $0x108] sm:$0xff]
        %v850 = vld [vmem:[#allocation2 + $0x110] sm:$0xff]
        %v851 = vld [vmem:[#allocation2 + $0x120] sm:$0xff]
        %v852 = vld [vmem:[#allocation2 + $0x128] sm:$0xff]
        %v853 = vld [vmem:[#allocation2 + $0x138] sm:$0xff]
        %v854 = vld [vmem:[#allocation2 + $0x140] sm:$0xff]
        %v855 = vld [vmem:[#allocation2 + $0x150] sm:$0xff]
        %v856 = vld [vmem:[#allocation2 + $0x158] sm:$0xff]
        %v857 = vld [vmem:[#allocation2 + $0x168] sm:$0xff]
        %v858 = vld [vmem:[#allocation2 + $0x170] sm:$0xff]
        %v859 = vlaneseq
        %v860 = vshrl.u32 %v859, 7
        %v861 = vsub.s32 0, %v860
        %v862 = vrot.slane %v824, %v861
        %v863 = vmul.f32 %v827, %v862
        %v864 = vmul.f32 %v828, %v862
        %v865 = vmul.f32 %v829, %v862
        %v866 = vmul.f32 %v830, %v862
        %v867 = vmul.f32 %v831, %v862
        %v868 = vmul.f32 %v832, %v862
        %v869 = vmul.f32 %v833, %v862
        %v870 = vmul.f32 %v834, %v862
        %v871 = vmul.f32 %v835, %v862
        %v872 = vmul.f32 %v836, %v862
        %v873 = vmul.f32 %v837, %v862
        %v874 = vmul.f32 %v838, %v862
        %v875 = vmul.f32 %v839, %v862
        %v876 = vmul.f32 %v840, %v862
        %v877 = vmul.f32 %v841, %v862
        %v878 = vmul.f32 %v842, %v862
        %v879 = vmul.f32 %v843, %v862
        %v880 = vmul.f32 %v844, %v862
        %v881 = vmul.f32 %v845, %v862
        %v882 = vmul.f32 %v846, %v862
        %v883 = vmul.f32 %v847, %v862
        %v884 = vmul.f32 %v848, %v862
        %v885 = vmul.f32 %v849, %v862
        %v886 = vmul.f32 %v850, %v862
        %v887 = vmul.f32 %v851, %v862
        %v888 = vmul.f32 %v852, %v862
        %v889 = vmul.f32 %v853, %v862
        %v890 = vmul.f32 %v854, %v862
        %v891 = vmul.f32 %v855, %v862
        %v892 = vmul.f32 %v856, %v862
        %v893 = vmul.f32 %v857, %v862
        %v894 = vmul.f32 %v858, %v862
        %v895 = vadd.f32 %v863, 0.0
        %v896 = vadd.f32 %v864, 0.0
        %v897 = vadd.f32 %v865, 0.0
        %v898 = vadd.f32 %v866, 0.0
        %v899 = vadd.f32 %v867, 0.0
        %v900 = vadd.f32 %v868, 0.0
        %v901 = vadd.f32 %v869, 0.0
        %v902 = vadd.f32 %v870, 0.0
        %v903 = vadd.f32 %v871, 0.0
        %v904 = vadd.f32 %v872, 0.0
        %v905 = vadd.f32 %v873, 0.0
        %v906 = vadd.f32 %v874, 0.0
        %v907 = vadd.f32 %v875, 0.0
        %v908 = vadd.f32 %v876, 0.0
        %v909 = vadd.f32 %v877, 0.0
        %v910 = vadd.f32 %v878, 0.0
        %v911 = vadd.f32 %v879, 0.0
        %v912 = vadd.f32 %v880, 0.0
        %v913 = vadd.f32 %v881, 0.0
        %v914 = vadd.f32 %v882, 0.0
        %v915 = vadd.f32 %v883, 0.0
        %v916 = vadd.f32 %v884, 0.0
        %v917 = vadd.f32 %v885, 0.0
        %v918 = vadd.f32 %v886, 0.0
        %v919 = vadd.f32 %v887, 0.0
        %v920 = vadd.f32 %v888, 0.0
        %v921 = vadd.f32 %v889, 0.0
        %v922 = vadd.f32 %v890, 0.0
        %v923 = vadd.f32 %v891, 0.0
        %v924 = vadd.f32 %v892, 0.0
        %v925 = vadd.f32 %v893, 0.0
        %v926 = vadd.f32 %v894, 0.0
        %v927 = vld [vmem:[#allocation2 + $0x1] sm:$0xff]
        %v928 = vld [vmem:[#allocation2 + $0x9] sm:$0xff]
        %v929 = vld [vmem:[#allocation2 + $0x19] sm:$0xff]
        %v930 = vld [vmem:[#allocation2 + $0x21] sm:$0xff]
        %v931 = vld [vmem:[#allocation2 + $0x31] sm:$0xff]
        %v932 = vld [vmem:[#allocation2 + $0x39] sm:$0xff]
        %v933 = vld [vmem:[#allocation2 + $0x49] sm:$0xff]
        %v934 = vld [vmem:[#allocation2 + $0x51] sm:$0xff]
        %v935 = vld [vmem:[#allocation2 + $0x61] sm:$0xff]
        %v936 = vld [vmem:[#allocation2 + $0x69] sm:$0xff]
        %v937 = vld [vmem:[#allocation2 + $0x79] sm:$0xff]
        %v938 = vld [vmem:[#allocation2 + $0x81] sm:$0xff]
        %v939 = vld [vmem:[#allocation2 + $0x91] sm:$0xff]
        %v940 = vld [vmem:[#allocation2 + $0x99] sm:$0xff]
        %v941 = vld [vmem:[#allocation2 + $0xa9] sm:$0xff]
        %v942 = vld [vmem:[#allocation2 + $0xb1] sm:$0xff]
        %v943 = vld [vmem:[#allocation2 + $0xc1] sm:$0xff]
        %v944 = vld [vmem:[#allocation2 + $0xc9] sm:$0xff]
        %v945 = vld [vmem:[#allocation2 + $0xd9] sm:$0xff]
        %v946 = vld [vmem:[#allocation2 + $0xe1] sm:$0xff]
        %v947 = vld [vmem:[#allocation2 + $0xf1] sm:$0xff]
        %v948 = vld [vmem:[#allocation2 + $0xf9] sm:$0xff]
        %v949 = vld [vmem:[#allocation2 + $0x109] sm:$0xff]
        %v950 = vld [vmem:[#allocation2 + $0x111] sm:$0xff]
        %v951 = vld [vmem:[#allocation2 + $0x121] sm:$0xff]
        %v952 = vld [vmem:[#allocation2 + $0x129] sm:$0xff]
        %v953 = vld [vmem:[#allocation2 + $0x139] sm:$0xff]
        %v954 = vld [vmem:[#allocation2 + $0x141] sm:$0xff]
        %v955 = vld [vmem:[#allocation2 + $0x151] sm:$0xff]
        %v956 = vld [vmem:[#allocation2 + $0x159] sm:$0xff]
        %v957 = vld [vmem:[#allocation2 + $0x169] sm:$0xff]
        %v958 = vld [vmem:[#allocation2 + $0x171] sm:$0xff]
        %v959 = vlaneseq
        %v960 = vshrl.u32 %v959, 7
        %v961 = vsub.s32 1, %v960
        %v962 = vrot.slane %v824, %v961
        %v963 = vmul.f32 %v927, %v962
        %v964 = vmul.f32 %v928, %v962
        %v965 = vmul.f32 %v929, %v962
        %v966 = vmul.f32 %v930, %v962
        %v967 = vmul.f32 %v931, %v962
        %v968 = vmul.f32 %v932, %v962
        %v969 = vmul.f32 %v933, %v962
        %v970 = vmul.f32 %v934, %v962
        %v971 = vmul.f32 %v935, %v962
        %v972 = vmul.f32 %v936, %v962
        %v973 = vmul.f32 %v937, %v962
        %v974 = vmul.f32 %v938, %v962
        %v975 = vmul.f32 %v939, %v962
        %v976 = vmul.f32 %v940, %v962
        %v977 = vmul.f32 %v941, %v962
        %v978 = vmul.f32 %v942, %v962
        %v979 = vmul.f32 %v943, %v962
        %v980 = vmul.f32 %v944, %v962
        %v981 = vmul.f32 %v945, %v962
        %v982 = vmul.f32 %v946, %v962
        %v983 = vmul.f32 %v947, %v962
        %v984 = vmul.f32 %v948, %v962
        %v985 = vmul.f32 %v949, %v962
        %v986 = vmul.f32 %v950, %v962
        %v987 = vmul.f32 %v951, %v962
        %v988 = vmul.f32 %v952, %v962
        %v989 = vmul.f32 %v953, %v962
        %v990 = vmul.f32 %v954, %v962
        %v991 = vmul.f32 %v955, %v962
        %v992 = vmul.f32 %v956, %v962
        %v993 = vmul.f32 %v957, %v962
        %v994 = vmul.f32 %v958, %v962
        %v995 = vadd.f32 %v895, %v963
        %v996 = vadd.f32 %v896, %v964
        %v997 = vadd.f32 %v897, %v965
        %v998 = vadd.f32 %v898, %v966
        %v999 = vadd.f32 %v899, %v967
        %v1000 = vadd.f32 %v900, %v968
        %v1001 = vadd.f32 %v901, %v969
        %v1002 = vadd.f32 %v902, %v970
        %v1003 = vadd.f32 %v903, %v971
        %v1004 = vadd.f32 %v904, %v972
        %v1005 = vadd.f32 %v905, %v973
        %v1006 = vadd.f32 %v906, %v974
        %v1007 = vadd.f32 %v907, %v975
        %v1008 = vadd.f32 %v908, %v976
        %v1009 = vadd.f32 %v909, %v977
        %v1010 = vadd.f32 %v910, %v978
        %v1011 = vadd.f32 %v911, %v979
        %v1012 = vadd.f32 %v912, %v980
        %v1013 = vadd.f32 %v913, %v981
        %v1014 = vadd.f32 %v914, %v982
        %v1015 = vadd.f32 %v915, %v983
        %v1016 = vadd.f32 %v916, %v984
        %v1017 = vadd.f32 %v917, %v985
        %v1018 = vadd.f32 %v918, %v986
        %v1019 = vadd.f32 %v919, %v987
        %v1020 = vadd.f32 %v920, %v988
        %v1021 = vadd.f32 %v921, %v989
        %v1022 = vadd.f32 %v922, %v990
        %v1023 = vadd.f32 %v923, %v991
        %v1024 = vadd.f32 %v924, %v992
        %v1025 = vadd.f32 %v925, %v993
        %v1026 = vadd.f32 %v926, %v994
        %v1027 = vld [vmem:[#allocation2 + $0x2] sm:$0xff]
        %v1028 = vld [vmem:[#allocation2 + $0xa] sm:$0xff]
        %v1029 = vld [vmem:[#allocation2 + $0x1a] sm:$0xff]
        %v1030 = vld [vmem:[#allocation2 + $0x22] sm:$0xff]
        %v1031 = vld [vmem:[#allocation2 + $0x32] sm:$0xff]
        %v1032 = vld [vmem:[#allocation2 + $0x3a] sm:$0xff]
        %v1033 = vld [vmem:[#allocation2 + $0x4a] sm:$0xff]
        %v1034 = vld [vmem:[#allocation2 + $0x52] sm:$0xff]
        %v1035 = vld [vmem:[#allocation2 + $0x62] sm:$0xff]
        %v1036 = vld [vmem:[#allocation2 + $0x6a] sm:$0xff]
        %v1037 = vld [vmem:[#allocation2 + $0x7a] sm:$0xff]
        %v1038 = vld [vmem:[#allocation2 + $0x82] sm:$0xff]
        %v1039 = vld [vmem:[#allocation2 + $0x92] sm:$0xff]
        %v1040 = vld [vmem:[#allocation2 + $0x9a] sm:$0xff]
        %v1041 = vld [vmem:[#allocation2 + $0xaa] sm:$0xff]
        %v1042 = vld [vmem:[#allocation2 + $0xb2] sm:$0xff]
        %v1043 = vld [vmem:[#allocation2 + $0xc2] sm:$0xff]
        %v1044 = vld [vmem:[#allocation2 + $0xca] sm:$0xff]
        %v1045 = vld [vmem:[#allocation2 + $0xda] sm:$0xff]
        %v1046 = vld [vmem:[#allocation2 + $0xe2] sm:$0xff]
        %v1047 = vld [vmem:[#allocation2 + $0xf2] sm:$0xff]
        %v1048 = vld [vmem:[#allocation2 + $0xfa] sm:$0xff]
        %v1049 = vld [vmem:[#allocation2 + $0x10a] sm:$0xff]
        %v1050 = vld [vmem:[#allocation2 + $0x112] sm:$0xff]
        %v1051 = vld [vmem:[#allocation2 + $0x122] sm:$0xff]
        %v1052 = vld [vmem:[#allocation2 + $0x12a] sm:$0xff]
        %v1053 = vld [vmem:[#allocation2 + $0x13a] sm:$0xff]
        %v1054 = vld [vmem:[#allocation2 + $0x142] sm:$0xff]
        %v1055 = vld [vmem:[#allocation2 + $0x152] sm:$0xff]
        %v1056 = vld [vmem:[#allocation2 + $0x15a] sm:$0xff]
        %v1057 = vld [vmem:[#allocation2 + $0x16a] sm:$0xff]
        %v1058 = vld [vmem:[#allocation2 + $0x172] sm:$0xff]
        %v1059 = vlaneseq
        %v1060 = vshrl.u32 %v1059, 7
        %v1061 = vsub.s32 2, %v1060
        %v1062 = vrot.slane %v824, %v1061
        %v1063 = vmul.f32 %v1027, %v1062
        %v1064 = vmul.f32 %v1028, %v1062
        %v1065 = vmul.f32 %v1029, %v1062
        %v1066 = vmul.f32 %v1030, %v1062
        %v1067 = vmul.f32 %v1031, %v1062
        %v1068 = vmul.f32 %v1032, %v1062
        %v1069 = vmul.f32 %v1033, %v1062
        %v1070 = vmul.f32 %v1034, %v1062
        %v1071 = vmul.f32 %v1035, %v1062
        %v1072 = vmul.f32 %v1036, %v1062
        %v1073 = vmul.f32 %v1037, %v1062
        %v1074 = vmul.f32 %v1038, %v1062
        %v1075 = vmul.f32 %v1039, %v1062
        %v1076 = vmul.f32 %v1040, %v1062
        %v1077 = vmul.f32 %v1041, %v1062
        %v1078 = vmul.f32 %v1042, %v1062
        %v1079 = vmul.f32 %v1043, %v1062
        %v1080 = vmul.f32 %v1044, %v1062
        %v1081 = vmul.f32 %v1045, %v1062
        %v1082 = vmul.f32 %v1046, %v1062
        %v1083 = vmul.f32 %v1047, %v1062
        %v1084 = vmul.f32 %v1048, %v1062
        %v1085 = vmul.f32 %v1049, %v1062
        %v1086 = vmul.f32 %v1050, %v1062
        %v1087 = vmul.f32 %v1051, %v1062
        %v1088 = vmul.f32 %v1052, %v1062
        %v1089 = vmul.f32 %v1053, %v1062
        %v1090 = vmul.f32 %v1054, %v1062
        %v1091 = vmul.f32 %v1055, %v1062
        %v1092 = vmul.f32 %v1056, %v1062
        %v1093 = vmul.f32 %v1057, %v1062
        %v1094 = vmul.f32 %v1058, %v1062
        %v1095 = vadd.f32 %v995, %v1063
        %v1096 = vadd.f32 %v996, %v1064
        %v1097 = vadd.f32 %v997, %v1065
        %v1098 = vadd.f32 %v998, %v1066
        %v1099 = vadd.f32 %v999, %v1067
        %v1100 = vadd.f32 %v1000, %v1068
        %v1101 = vadd.f32 %v1001, %v1069
        %v1102 = vadd.f32 %v1002, %v1070
        %v1103 = vadd.f32 %v1003, %v1071
        %v1104 = vadd.f32 %v1004, %v1072
        %v1105 = vadd.f32 %v1005, %v1073
        %v1106 = vadd.f32 %v1006, %v1074
        %v1107 = vadd.f32 %v1007, %v1075
        %v1108 = vadd.f32 %v1008, %v1076
        %v1109 = vadd.f32 %v1009, %v1077
        %v1110 = vadd.f32 %v1010, %v1078
        %v1111 = vadd.f32 %v1011, %v1079
        %v1112 = vadd.f32 %v1012, %v1080
        %v1113 = vadd.f32 %v1013, %v1081
        %v1114 = vadd.f32 %v1014, %v1082
        %v1115 = vadd.f32 %v1015, %v1083
        %v1116 = vadd.f32 %v1016, %v1084
        %v1117 = vadd.f32 %v1017, %v1085
        %v1118 = vadd.f32 %v1018, %v1086
        %v1119 = vadd.f32 %v1019, %v1087
        %v1120 = vadd.f32 %v1020, %v1088
        %v1121 = vadd.f32 %v1021, %v1089
        %v1122 = vadd.f32 %v1022, %v1090
        %v1123 = vadd.f32 %v1023, %v1091
        %v1124 = vadd.f32 %v1024, %v1092
        %v1125 = vadd.f32 %v1025, %v1093
        %v1126 = vadd.f32 %v1026, %v1094
        %v1127 = vld [vmem:[%s791] sm:$0xff]
        %v1128 = vld [vmem:[%s791 + $0x8] sm:$0xff]
        %v1129 = vld [vmem:[%s791 + $0x18] sm:$0xff]
        %v1130 = vld [vmem:[%s791 + $0x20] sm:$0xff]
        %v1131 = vld [vmem:[%s791 + $0x30] sm:$0xff]
        %v1132 = vld [vmem:[%s791 + $0x38] sm:$0xff]
        %v1133 = vld [vmem:[%s791 + $0x48] sm:$0xff]
        %v1134 = vld [vmem:[%s791 + $0x50] sm:$0xff]
        %v1135 = vld [vmem:[%s791 + $0x60] sm:$0xff]
        %v1136 = vld [vmem:[%s791 + $0x68] sm:$0xff]
        %v1137 = vld [vmem:[%s791 + $0x78] sm:$0xff]
        %v1138 = vld [vmem:[%s791 + $0x80] sm:$0xff]
        %v1139 = vld [vmem:[%s791 + $0x90] sm:$0xff]
        %v1140 = vld [vmem:[%s791 + $0x98] sm:$0xff]
        %v1141 = vld [vmem:[%s791 + $0xa8] sm:$0xff]
        %v1142 = vld [vmem:[%s791 + $0xb0] sm:$0xff]
        %v1143 = vld [vmem:[%s791 + $0xc0] sm:$0xff]
        %v1144 = vld [vmem:[%s791 + $0xc8] sm:$0xff]
        %v1145 = vld [vmem:[%s791 + $0xd8] sm:$0xff]
        %v1146 = vld [vmem:[%s791 + $0xe0] sm:$0xff]
        %v1147 = vld [vmem:[%s791 + $0xf0] sm:$0xff]
        %v1148 = vld [vmem:[%s791 + $0xf8] sm:$0xff]
        %v1149 = vld [vmem:[%s791 + $0x108] sm:$0xff]
        %v1150 = vld [vmem:[%s791 + $0x110] sm:$0xff]
        %v1151 = vld [vmem:[%s791 + $0x120] sm:$0xff]
        %v1152 = vld [vmem:[%s791 + $0x128] sm:$0xff]
        %v1153 = vld [vmem:[%s791 + $0x138] sm:$0xff]
        %v1154 = vld [vmem:[%s791 + $0x140] sm:$0xff]
        %v1155 = vld [vmem:[%s791 + $0x150] sm:$0xff]
        %v1156 = vld [vmem:[%s791 + $0x158] sm:$0xff]
        %v1157 = vld [vmem:[%s791 + $0x168] sm:$0xff]
        %v1158 = vld [vmem:[%s791 + $0x170] sm:$0xff]
        %v1159 = vlaneseq
        %v1160 = vshrl.u32 %v1159, 7
        %v1161 = vsub.s32 0, %v1160
        %v1162 = vrot.slane %v825, %v1161
        %v1163 = vmul.f32 %v1127, %v1162
        %v1164 = vmul.f32 %v1128, %v1162
        %v1165 = vmul.f32 %v1129, %v1162
        %v1166 = vmul.f32 %v1130, %v1162
        %v1167 = vmul.f32 %v1131, %v1162
        %v1168 = vmul.f32 %v1132, %v1162
        %v1169 = vmul.f32 %v1133, %v1162
        %v1170 = vmul.f32 %v1134, %v1162
        %v1171 = vmul.f32 %v1135, %v1162
        %v1172 = vmul.f32 %v1136, %v1162
        %v1173 = vmul.f32 %v1137, %v1162
        %v1174 = vmul.f32 %v1138, %v1162
        %v1175 = vmul.f32 %v1139, %v1162
        %v1176 = vmul.f32 %v1140, %v1162
        %v1177 = vmul.f32 %v1141, %v1162
        %v1178 = vmul.f32 %v1142, %v1162
        %v1179 = vmul.f32 %v1143, %v1162
        %v1180 = vmul.f32 %v1144, %v1162
        %v1181 = vmul.f32 %v1145, %v1162
        %v1182 = vmul.f32 %v1146, %v1162
        %v1183 = vmul.f32 %v1147, %v1162
        %v1184 = vmul.f32 %v1148, %v1162
        %v1185 = vmul.f32 %v1149, %v1162
        %v1186 = vmul.f32 %v1150, %v1162
        %v1187 = vmul.f32 %v1151, %v1162
        %v1188 = vmul.f32 %v1152, %v1162
        %v1189 = vmul.f32 %v1153, %v1162
        %v1190 = vmul.f32 %v1154, %v1162
        %v1191 = vmul.f32 %v1155, %v1162
        %v1192 = vmul.f32 %v1156, %v1162
        %v1193 = vmul.f32 %v1157, %v1162
        %v1194 = vmul.f32 %v1158, %v1162
        %v1195 = vadd.f32 %v1095, %v1163
        %v1196 = vadd.f32 %v1096, %v1164
        %v1197 = vadd.f32 %v1097, %v1165
        %v1198 = vadd.f32 %v1098, %v1166
        %v1199 = vadd.f32 %v1099, %v1167
        %v1200 = vadd.f32 %v1100, %v1168
        %v1201 = vadd.f32 %v1101, %v1169
        %v1202 = vadd.f32 %v1102, %v1170
        %v1203 = vadd.f32 %v1103, %v1171
        %v1204 = vadd.f32 %v1104, %v1172
        %v1205 = vadd.f32 %v1105, %v1173
        %v1206 = vadd.f32 %v1106, %v1174
        %v1207 = vadd.f32 %v1107, %v1175
        %v1208 = vadd.f32 %v1108, %v1176
        %v1209 = vadd.f32 %v1109, %v1177
        %v1210 = vadd.f32 %v1110, %v1178
        %v1211 = vadd.f32 %v1111, %v1179
        %v1212 = vadd.f32 %v1112, %v1180
        %v1213 = vadd.f32 %v1113, %v1181
        %v1214 = vadd.f32 %v1114, %v1182
        %v1215 = vadd.f32 %v1115, %v1183
        %v1216 = vadd.f32 %v1116, %v1184
        %v1217 = vadd.f32 %v1117, %v1185
        %v1218 = vadd.f32 %v1118, %v1186
        %v1219 = vadd.f32 %v1119, %v1187
        %v1220 = vadd.f32 %v1120, %v1188
        %v1221 = vadd.f32 %v1121, %v1189
        %v1222 = vadd.f32 %v1122, %v1190
        %v1223 = vadd.f32 %v1123, %v1191
        %v1224 = vadd.f32 %v1124, %v1192
        %v1225 = vadd.f32 %v1125, %v1193
        %v1226 = vadd.f32 %v1126, %v1194
        %v1227 = vld [vmem:[%s791 + $0x1] sm:$0xff]
        %v1228 = vld [vmem:[%s791 + $0x9] sm:$0xff]
        %v1229 = vld [vmem:[%s791 + $0x19] sm:$0xff]
        %v1230 = vld [vmem:[%s791 + $0x21] sm:$0xff]
        %v1231 = vld [vmem:[%s791 + $0x31] sm:$0xff]
        %v1232 = vld [vmem:[%s791 + $0x39] sm:$0xff]
        %v1233 = vld [vmem:[%s791 + $0x49] sm:$0xff]
        %v1234 = vld [vmem:[%s791 + $0x51] sm:$0xff]
        %v1235 = vld [vmem:[%s791 + $0x61] sm:$0xff]
        %v1236 = vld [vmem:[%s791 + $0x69] sm:$0xff]
        %v1237 = vld [vmem:[%s791 + $0x79] sm:$0xff]
        %v1238 = vld [vmem:[%s791 + $0x81] sm:$0xff]
        %v1239 = vld [vmem:[%s791 + $0x91] sm:$0xff]
        %v1240 = vld [vmem:[%s791 + $0x99] sm:$0xff]
        %v1241 = vld [vmem:[%s791 + $0xa9] sm:$0xff]
        %v1242 = vld [vmem:[%s791 + $0xb1] sm:$0xff]
        %v1243 = vld [vmem:[%s791 + $0xc1] sm:$0xff]
        %v1244 = vld [vmem:[%s791 + $0xc9] sm:$0xff]
        %v1245 = vld [vmem:[%s791 + $0xd9] sm:$0xff]
        %v1246 = vld [vmem:[%s791 + $0xe1] sm:$0xff]
        %v1247 = vld [vmem:[%s791 + $0xf1] sm:$0xff]
        %v1248 = vld [vmem:[%s791 + $0xf9] sm:$0xff]
        %v1249 = vld [vmem:[%s791 + $0x109] sm:$0xff]
        %v1250 = vld [vmem:[%s791 + $0x111] sm:$0xff]
        %v1251 = vld [vmem:[%s791 + $0x121] sm:$0xff]
        %v1252 = vld [vmem:[%s791 + $0x129] sm:$0xff]
        %v1253 = vld [vmem:[%s791 + $0x139] sm:$0xff]
        %v1254 = vld [vmem:[%s791 + $0x141] sm:$0xff]
        %v1255 = vld [vmem:[%s791 + $0x151] sm:$0xff]
        %v1256 = vld [vmem:[%s791 + $0x159] sm:$0xff]
        %v1257 = vld [vmem:[%s791 + $0x169] sm:$0xff]
        %v1258 = vld [vmem:[%s791 + $0x171] sm:$0xff]
        %v1259 = vlaneseq
        %v1260 = vshrl.u32 %v1259, 7
        %v1261 = vsub.s32 1, %v1260
        %v1262 = vrot.slane %v825, %v1261
        %v1263 = vmul.f32 %v1227, %v1262
        %v1264 = vmul.f32 %v1228, %v1262
        %v1265 = vmul.f32 %v1229, %v1262
        %v1266 = vmul.f32 %v1230, %v1262
        %v1267 = vmul.f32 %v1231, %v1262
        %v1268 = vmul.f32 %v1232, %v1262
        %v1269 = vmul.f32 %v1233, %v1262
        %v1270 = vmul.f32 %v1234, %v1262
        %v1271 = vmul.f32 %v1235, %v1262
        %v1272 = vmul.f32 %v1236, %v1262
        %v1273 = vmul.f32 %v1237, %v1262
        %v1274 = vmul.f32 %v1238, %v1262
        %v1275 = vmul.f32 %v1239, %v1262
        %v1276 = vmul.f32 %v1240, %v1262
        %v1277 = vmul.f32 %v1241, %v1262
        %v1278 = vmul.f32 %v1242, %v1262
        %v1279 = vmul.f32 %v1243, %v1262
        %v1280 = vmul.f32 %v1244, %v1262
        %v1281 = vmul.f32 %v1245, %v1262
        %v1282 = vmul.f32 %v1246, %v1262
        %v1283 = vmul.f32 %v1247, %v1262
        %v1284 = vmul.f32 %v1248, %v1262
        %v1285 = vmul.f32 %v1249, %v1262
        %v1286 = vmul.f32 %v1250, %v1262
        %v1287 = vmul.f32 %v1251, %v1262
        %v1288 = vmul.f32 %v1252, %v1262
        %v1289 = vmul.f32 %v1253, %v1262
        %v1290 = vmul.f32 %v1254, %v1262
        %v1291 = vmul.f32 %v1255, %v1262
        %v1292 = vmul.f32 %v1256, %v1262
        %v1293 = vmul.f32 %v1257, %v1262
        %v1294 = vmul.f32 %v1258, %v1262
        %v1295 = vadd.f32 %v1195, %v1263
        %v1296 = vadd.f32 %v1196, %v1264
        %v1297 = vadd.f32 %v1197, %v1265
        %v1298 = vadd.f32 %v1198, %v1266
        %v1299 = vadd.f32 %v1199, %v1267
        %v1300 = vadd.f32 %v1200, %v1268
        %v1301 = vadd.f32 %v1201, %v1269
        %v1302 = vadd.f32 %v1202, %v1270
        %v1303 = vadd.f32 %v1203, %v1271
        %v1304 = vadd.f32 %v1204, %v1272
        %v1305 = vadd.f32 %v1205, %v1273
        %v1306 = vadd.f32 %v1206, %v1274
        %v1307 = vadd.f32 %v1207, %v1275
        %v1308 = vadd.f32 %v1208, %v1276
        %v1309 = vadd.f32 %v1209, %v1277
        %v1310 = vadd.f32 %v1210, %v1278
        %v1311 = vadd.f32 %v1211, %v1279
        %v1312 = vadd.f32 %v1212, %v1280
        %v1313 = vadd.f32 %v1213, %v1281
        %v1314 = vadd.f32 %v1214, %v1282
        %v1315 = vadd.f32 %v1215, %v1283
        %v1316 = vadd.f32 %v1216, %v1284
        %v1317 = vadd.f32 %v1217, %v1285
        %v1318 = vadd.f32 %v1218, %v1286
        %v1319 = vadd.f32 %v1219, %v1287
        %v1320 = vadd.f32 %v1220, %v1288
        %v1321 = vadd.f32 %v1221, %v1289
        %v1322 = vadd.f32 %v1222, %v1290
        %v1323 = vadd.f32 %v1223, %v1291
        %v1324 = vadd.f32 %v1224, %v1292
        %v1325 = vadd.f32 %v1225, %v1293
        %v1326 = vadd.f32 %v1226, %v1294
        %v1327 = vld [vmem:[%s791 + $0x2] sm:$0xff]
        %v1328 = vld [vmem:[%s791 + $0xa] sm:$0xff]
        %v1329 = vld [vmem:[%s791 + $0x1a] sm:$0xff]
        %v1330 = vld [vmem:[%s791 + $0x22] sm:$0xff]
        %v1331 = vld [vmem:[%s791 + $0x32] sm:$0xff]
        %v1332 = vld [vmem:[%s791 + $0x3a] sm:$0xff]
        %v1333 = vld [vmem:[%s791 + $0x4a] sm:$0xff]
        %v1334 = vld [vmem:[%s791 + $0x52] sm:$0xff]
        %v1335 = vld [vmem:[%s791 + $0x62] sm:$0xff]
        %v1336 = vld [vmem:[%s791 + $0x6a] sm:$0xff]
        %v1337 = vld [vmem:[%s791 + $0x7a] sm:$0xff]
        %v1338 = vld [vmem:[%s791 + $0x82] sm:$0xff]
        %v1339 = vld [vmem:[%s791 + $0x92] sm:$0xff]
        %v1340 = vld [vmem:[%s791 + $0x9a] sm:$0xff]
        %v1341 = vld [vmem:[%s791 + $0xaa] sm:$0xff]
        %v1342 = vld [vmem:[%s791 + $0xb2] sm:$0xff]
        %v1343 = vld [vmem:[%s791 + $0xc2] sm:$0xff]
        %v1344 = vld [vmem:[%s791 + $0xca] sm:$0xff]
        %v1345 = vld [vmem:[%s791 + $0xda] sm:$0xff]
        %v1346 = vld [vmem:[%s791 + $0xe2] sm:$0xff]
        %v1347 = vld [vmem:[%s791 + $0xf2] sm:$0xff]
        %v1348 = vld [vmem:[%s791 + $0xfa] sm:$0xff]
        %v1349 = vld [vmem:[%s791 + $0x10a] sm:$0xff]
        %v1350 = vld [vmem:[%s791 + $0x112] sm:$0xff]
        %v1351 = vld [vmem:[%s791 + $0x122] sm:$0xff]
        %v1352 = vld [vmem:[%s791 + $0x12a] sm:$0xff]
        %v1353 = vld [vmem:[%s791 + $0x13a] sm:$0xff]
        %v1354 = vld [vmem:[%s791 + $0x142] sm:$0xff]
        %v1355 = vld [vmem:[%s791 + $0x152] sm:$0xff]
        %v1356 = vld [vmem:[%s791 + $0x15a] sm:$0xff]
        %v1357 = vld [vmem:[%s791 + $0x16a] sm:$0xff]
        %v1358 = vld [vmem:[%s791 + $0x172] sm:$0xff]
        %v1359 = vlaneseq
        %v1360 = vshrl.u32 %v1359, 7
        %v1361 = vsub.s32 2, %v1360
        %v1362 = vrot.slane %v825, %v1361
        %v1363 = vmul.f32 %v1327, %v1362
        %v1364 = vmul.f32 %v1328, %v1362
        %v1365 = vmul.f32 %v1329, %v1362
        %v1366 = vmul.f32 %v1330, %v1362
        %v1367 = vmul.f32 %v1331, %v1362
        %v1368 = vmul.f32 %v1332, %v1362
        %v1369 = vmul.f32 %v1333, %v1362
        %v1370 = vmul.f32 %v1334, %v1362
        %v1371 = vmul.f32 %v1335, %v1362
        %v1372 = vmul.f32 %v1336, %v1362
        %v1373 = vmul.f32 %v1337, %v1362
        %v1374 = vmul.f32 %v1338, %v1362
        %v1375 = vmul.f32 %v1339, %v1362
        %v1376 = vmul.f32 %v1340, %v1362
        %v1377 = vmul.f32 %v1341, %v1362
        %v1378 = vmul.f32 %v1342, %v1362
        %v1379 = vmul.f32 %v1343, %v1362
        %v1380 = vmul.f32 %v1344, %v1362
        %v1381 = vmul.f32 %v1345, %v1362
        %v1382 = vmul.f32 %v1346, %v1362
        %v1383 = vmul.f32 %v1347, %v1362
        %v1384 = vmul.f32 %v1348, %v1362
        %v1385 = vmul.f32 %v1349, %v1362
        %v1386 = vmul.f32 %v1350, %v1362
        %v1387 = vmul.f32 %v1351, %v1362
        %v1388 = vmul.f32 %v1352, %v1362
        %v1389 = vmul.f32 %v1353, %v1362
        %v1390 = vmul.f32 %v1354, %v1362
        %v1391 = vmul.f32 %v1355, %v1362
        %v1392 = vmul.f32 %v1356, %v1362
        %v1393 = vmul.f32 %v1357, %v1362
        %v1394 = vmul.f32 %v1358, %v1362
        %v1395 = vadd.f32 %v1295, %v1363
        %v1396 = vadd.f32 %v1296, %v1364
        %v1397 = vadd.f32 %v1297, %v1365
        %v1398 = vadd.f32 %v1298, %v1366
        %v1399 = vadd.f32 %v1299, %v1367
        %v1400 = vadd.f32 %v1300, %v1368
        %v1401 = vadd.f32 %v1301, %v1369
        %v1402 = vadd.f32 %v1302, %v1370
        %v1403 = vadd.f32 %v1303, %v1371
        %v1404 = vadd.f32 %v1304, %v1372
        %v1405 = vadd.f32 %v1305, %v1373
        %v1406 = vadd.f32 %v1306, %v1374
        %v1407 = vadd.f32 %v1307, %v1375
        %v1408 = vadd.f32 %v1308, %v1376
        %v1409 = vadd.f32 %v1309, %v1377
        %v1410 = vadd.f32 %v1310, %v1378
        %v1411 = vadd.f32 %v1311, %v1379
        %v1412 = vadd.f32 %v1312, %v1380
        %v1413 = vadd.f32 %v1313, %v1381
        %v1414 = vadd.f32 %v1314, %v1382
        %v1415 = vadd.f32 %v1315, %v1383
        %v1416 = vadd.f32 %v1316, %v1384
        %v1417 = vadd.f32 %v1317, %v1385
        %v1418 = vadd.f32 %v1318, %v1386
        %v1419 = vadd.f32 %v1319, %v1387
        %v1420 = vadd.f32 %v1320, %v1388
        %v1421 = vadd.f32 %v1321, %v1389
        %v1422 = vadd.f32 %v1322, %v1390
        %v1423 = vadd.f32 %v1323, %v1391
        %v1424 = vadd.f32 %v1324, %v1392
        %v1425 = vadd.f32 %v1325, %v1393
        %v1426 = vadd.f32 %v1326, %v1394
        %s1427 = scalar_lea.vmem [#allocation2], 48
        %v1428 = vld [vmem:[%s1427] sm:$0xff]
        %v1429 = vld [vmem:[%s1427 + $0x8] sm:$0xff]
        %v1430 = vld [vmem:[%s1427 + $0x18] sm:$0xff]
        %v1431 = vld [vmem:[%s1427 + $0x20] sm:$0xff]
        %v1432 = vld [vmem:[%s1427 + $0x30] sm:$0xff]
        %v1433 = vld [vmem:[%s1427 + $0x38] sm:$0xff]
        %v1434 = vld [vmem:[%s1427 + $0x48] sm:$0xff]
        %v1435 = vld [vmem:[%s1427 + $0x50] sm:$0xff]
        %v1436 = vld [vmem:[%s1427 + $0x60] sm:$0xff]
        %v1437 = vld [vmem:[%s1427 + $0x68] sm:$0xff]
        %v1438 = vld [vmem:[%s1427 + $0x78] sm:$0xff]
        %v1439 = vld [vmem:[%s1427 + $0x80] sm:$0xff]
        %v1440 = vld [vmem:[%s1427 + $0x90] sm:$0xff]
        %v1441 = vld [vmem:[%s1427 + $0x98] sm:$0xff]
        %v1442 = vld [vmem:[%s1427 + $0xa8] sm:$0xff]
        %v1443 = vld [vmem:[%s1427 + $0xb0] sm:$0xff]
        %v1444 = vld [vmem:[%s1427 + $0xc0] sm:$0xff]
        %v1445 = vld [vmem:[%s1427 + $0xc8] sm:$0xff]
        %v1446 = vld [vmem:[%s1427 + $0xd8] sm:$0xff]
        %v1447 = vld [vmem:[%s1427 + $0xe0] sm:$0xff]
        %v1448 = vld [vmem:[%s1427 + $0xf0] sm:$0xff]
        %v1449 = vld [vmem:[%s1427 + $0xf8] sm:$0xff]
        %v1450 = vld [vmem:[%s1427 + $0x108] sm:$0xff]
        %v1451 = vld [vmem:[%s1427 + $0x110] sm:$0xff]
        %v1452 = vld [vmem:[%s1427 + $0x120] sm:$0xff]
        %v1453 = vld [vmem:[%s1427 + $0x128] sm:$0xff]
        %v1454 = vld [vmem:[%s1427 + $0x138] sm:$0xff]
        %v1455 = vld [vmem:[%s1427 + $0x140] sm:$0xff]
        %v1456 = vld [vmem:[%s1427 + $0x150] sm:$0xff]
        %v1457 = vld [vmem:[%s1427 + $0x158] sm:$0xff]
        %v1458 = vld [vmem:[%s1427 + $0x168] sm:$0xff]
        %v1459 = vld [vmem:[%s1427 + $0x170] sm:$0xff]
        %v1460 = vlaneseq
        %v1461 = vshrl.u32 %v1460, 7
        %v1462 = vsub.s32 0, %v1461
        %v1463 = vrot.slane %v826, %v1462
        %v1464 = vmul.f32 %v1428, %v1463
        %v1465 = vmul.f32 %v1429, %v1463
        %v1466 = vmul.f32 %v1430, %v1463
        %v1467 = vmul.f32 %v1431, %v1463
        %v1468 = vmul.f32 %v1432, %v1463
        %v1469 = vmul.f32 %v1433, %v1463
        %v1470 = vmul.f32 %v1434, %v1463
        %v1471 = vmul.f32 %v1435, %v1463
        %v1472 = vmul.f32 %v1436, %v1463
        %v1473 = vmul.f32 %v1437, %v1463
        %v1474 = vmul.f32 %v1438, %v1463
        %v1475 = vmul.f32 %v1439, %v1463
        %v1476 = vmul.f32 %v1440, %v1463
        %v1477 = vmul.f32 %v1441, %v1463
        %v1478 = vmul.f32 %v1442, %v1463
        %v1479 = vmul.f32 %v1443, %v1463
        %v1480 = vmul.f32 %v1444, %v1463
        %v1481 = vmul.f32 %v1445, %v1463
        %v1482 = vmul.f32 %v1446, %v1463
        %v1483 = vmul.f32 %v1447, %v1463
        %v1484 = vmul.f32 %v1448, %v1463
        %v1485 = vmul.f32 %v1449, %v1463
        %v1486 = vmul.f32 %v1450, %v1463
        %v1487 = vmul.f32 %v1451, %v1463
        %v1488 = vmul.f32 %v1452, %v1463
        %v1489 = vmul.f32 %v1453, %v1463
        %v1490 = vmul.f32 %v1454, %v1463
        %v1491 = vmul.f32 %v1455, %v1463
        %v1492 = vmul.f32 %v1456, %v1463
        %v1493 = vmul.f32 %v1457, %v1463
        %v1494 = vmul.f32 %v1458, %v1463
        %v1495 = vmul.f32 %v1459, %v1463
        %v1496 = vadd.f32 %v1395, %v1464
        %v1497 = vadd.f32 %v1396, %v1465
        %v1498 = vadd.f32 %v1397, %v1466
        %v1499 = vadd.f32 %v1398, %v1467
        %v1500 = vadd.f32 %v1399, %v1468
        %v1501 = vadd.f32 %v1400, %v1469
        %v1502 = vadd.f32 %v1401, %v1470
        %v1503 = vadd.f32 %v1402, %v1471
        %v1504 = vadd.f32 %v1403, %v1472
        %v1505 = vadd.f32 %v1404, %v1473
        %v1506 = vadd.f32 %v1405, %v1474
        %v1507 = vadd.f32 %v1406, %v1475
        %v1508 = vadd.f32 %v1407, %v1476
        %v1509 = vadd.f32 %v1408, %v1477
        %v1510 = vadd.f32 %v1409, %v1478
        %v1511 = vadd.f32 %v1410, %v1479
        %v1512 = vadd.f32 %v1411, %v1480
        %v1513 = vadd.f32 %v1412, %v1481
        %v1514 = vadd.f32 %v1413, %v1482
        %v1515 = vadd.f32 %v1414, %v1483
        %v1516 = vadd.f32 %v1415, %v1484
        %v1517 = vadd.f32 %v1416, %v1485
        %v1518 = vadd.f32 %v1417, %v1486
        %v1519 = vadd.f32 %v1418, %v1487
        %v1520 = vadd.f32 %v1419, %v1488
        %v1521 = vadd.f32 %v1420, %v1489
        %v1522 = vadd.f32 %v1421, %v1490
        %v1523 = vadd.f32 %v1422, %v1491
        %v1524 = vadd.f32 %v1423, %v1492
        %v1525 = vadd.f32 %v1424, %v1493
        %v1526 = vadd.f32 %v1425, %v1494
        %v1527 = vadd.f32 %v1426, %v1495
        %v1528 = vld [vmem:[%s1427 + $0x1] sm:$0xff]
        %v1529 = vld [vmem:[%s1427 + $0x9] sm:$0xff]
        %v1530 = vld [vmem:[%s1427 + $0x19] sm:$0xff]
        %v1531 = vld [vmem:[%s1427 + $0x21] sm:$0xff]
        %v1532 = vld [vmem:[%s1427 + $0x31] sm:$0xff]
        %v1533 = vld [vmem:[%s1427 + $0x39] sm:$0xff]
        %v1534 = vld [vmem:[%s1427 + $0x49] sm:$0xff]
        %v1535 = vld [vmem:[%s1427 + $0x51] sm:$0xff]
        %v1536 = vld [vmem:[%s1427 + $0x61] sm:$0xff]
        %v1537 = vld [vmem:[%s1427 + $0x69] sm:$0xff]
        %v1538 = vld [vmem:[%s1427 + $0x79] sm:$0xff]
        %v1539 = vld [vmem:[%s1427 + $0x81] sm:$0xff]
        %v1540 = vld [vmem:[%s1427 + $0x91] sm:$0xff]
        %v1541 = vld [vmem:[%s1427 + $0x99] sm:$0xff]
        %v1542 = vld [vmem:[%s1427 + $0xa9] sm:$0xff]
        %v1543 = vld [vmem:[%s1427 + $0xb1] sm:$0xff]
        %v1544 = vld [vmem:[%s1427 + $0xc1] sm:$0xff]
        %v1545 = vld [vmem:[%s1427 + $0xc9] sm:$0xff]
        %v1546 = vld [vmem:[%s1427 + $0xd9] sm:$0xff]
        %v1547 = vld [vmem:[%s1427 + $0xe1] sm:$0xff]
        %v1548 = vld [vmem:[%s1427 + $0xf1] sm:$0xff]
        %v1549 = vld [vmem:[%s1427 + $0xf9] sm:$0xff]
        %v1550 = vld [vmem:[%s1427 + $0x109] sm:$0xff]
        %v1551 = vld [vmem:[%s1427 + $0x111] sm:$0xff]
        %v1552 = vld [vmem:[%s1427 + $0x121] sm:$0xff]
        %v1553 = vld [vmem:[%s1427 + $0x129] sm:$0xff]
        %v1554 = vld [vmem:[%s1427 + $0x139] sm:$0xff]
        %v1555 = vld [vmem:[%s1427 + $0x141] sm:$0xff]
        %v1556 = vld [vmem:[%s1427 + $0x151] sm:$0xff]
        %v1557 = vld [vmem:[%s1427 + $0x159] sm:$0xff]
        %v1558 = vld [vmem:[%s1427 + $0x169] sm:$0xff]
        %v1559 = vld [vmem:[%s1427 + $0x171] sm:$0xff]
        %v1560 = vlaneseq
        %v1561 = vshrl.u32 %v1560, 7
        %v1562 = vsub.s32 1, %v1561
        %v1563 = vrot.slane %v826, %v1562
        %v1564 = vmul.f32 %v1528, %v1563
        %v1565 = vmul.f32 %v1529, %v1563
        %v1566 = vmul.f32 %v1530, %v1563
        %v1567 = vmul.f32 %v1531, %v1563
        %v1568 = vmul.f32 %v1532, %v1563
        %v1569 = vmul.f32 %v1533, %v1563
        %v1570 = vmul.f32 %v1534, %v1563
        %v1571 = vmul.f32 %v1535, %v1563
        %v1572 = vmul.f32 %v1536, %v1563
        %v1573 = vmul.f32 %v1537, %v1563
        %v1574 = vmul.f32 %v1538, %v1563
        %v1575 = vmul.f32 %v1539, %v1563
        %v1576 = vmul.f32 %v1540, %v1563
        %v1577 = vmul.f32 %v1541, %v1563
        %v1578 = vmul.f32 %v1542, %v1563
        %v1579 = vmul.f32 %v1543, %v1563
        %v1580 = vmul.f32 %v1544, %v1563
        %v1581 = vmul.f32 %v1545, %v1563
        %v1582 = vmul.f32 %v1546, %v1563
        %v1583 = vmul.f32 %v1547, %v1563
        %v1584 = vmul.f32 %v1548, %v1563
        %v1585 = vmul.f32 %v1549, %v1563
        %v1586 = vmul.f32 %v1550, %v1563
        %v1587 = vmul.f32 %v1551, %v1563
        %v1588 = vmul.f32 %v1552, %v1563
        %v1589 = vmul.f32 %v1553, %v1563
        %v1590 = vmul.f32 %v1554, %v1563
        %v1591 = vmul.f32 %v1555, %v1563
        %v1592 = vmul.f32 %v1556, %v1563
        %v1593 = vmul.f32 %v1557, %v1563
        %v1594 = vmul.f32 %v1558, %v1563
        %v1595 = vmul.f32 %v1559, %v1563
        %v1596 = vadd.f32 %v1496, %v1564
        %v1597 = vadd.f32 %v1497, %v1565
        %v1598 = vadd.f32 %v1498, %v1566
        %v1599 = vadd.f32 %v1499, %v1567
        %v1600 = vadd.f32 %v1500, %v1568
        %v1601 = vadd.f32 %v1501, %v1569
        %v1602 = vadd.f32 %v1502, %v1570
        %v1603 = vadd.f32 %v1503, %v1571
        %v1604 = vadd.f32 %v1504, %v1572
        %v1605 = vadd.f32 %v1505, %v1573
        %v1606 = vadd.f32 %v1506, %v1574
        %v1607 = vadd.f32 %v1507, %v1575
        %v1608 = vadd.f32 %v1508, %v1576
        %v1609 = vadd.f32 %v1509, %v1577
        %v1610 = vadd.f32 %v1510, %v1578
        %v1611 = vadd.f32 %v1511, %v1579
        %v1612 = vadd.f32 %v1512, %v1580
        %v1613 = vadd.f32 %v1513, %v1581
        %v1614 = vadd.f32 %v1514, %v1582
        %v1615 = vadd.f32 %v1515, %v1583
        %v1616 = vadd.f32 %v1516, %v1584
        %v1617 = vadd.f32 %v1517, %v1585
        %v1618 = vadd.f32 %v1518, %v1586
        %v1619 = vadd.f32 %v1519, %v1587
        %v1620 = vadd.f32 %v1520, %v1588
        %v1621 = vadd.f32 %v1521, %v1589
        %v1622 = vadd.f32 %v1522, %v1590
        %v1623 = vadd.f32 %v1523, %v1591
        %v1624 = vadd.f32 %v1524, %v1592
        %v1625 = vadd.f32 %v1525, %v1593
        %v1626 = vadd.f32 %v1526, %v1594
        %v1627 = vadd.f32 %v1527, %v1595
        %v1628 = vld [vmem:[%s1427 + $0x2] sm:$0xff]
        %v1629 = vld [vmem:[%s1427 + $0xa] sm:$0xff]
        %v1630 = vld [vmem:[%s1427 + $0x1a] sm:$0xff]
        %v1631 = vld [vmem:[%s1427 + $0x22] sm:$0xff]
        %v1632 = vld [vmem:[%s1427 + $0x32] sm:$0xff]
        %v1633 = vld [vmem:[%s1427 + $0x3a] sm:$0xff]
        %v1634 = vld [vmem:[%s1427 + $0x4a] sm:$0xff]
        %v1635 = vld [vmem:[%s1427 + $0x52] sm:$0xff]
        %v1636 = vld [vmem:[%s1427 + $0x62] sm:$0xff]
        %v1637 = vld [vmem:[%s1427 + $0x6a] sm:$0xff]
        %v1638 = vld [vmem:[%s1427 + $0x7a] sm:$0xff]
        %v1639 = vld [vmem:[%s1427 + $0x82] sm:$0xff]
        %v1640 = vld [vmem:[%s1427 + $0x92] sm:$0xff]
        %v1641 = vld [vmem:[%s1427 + $0x9a] sm:$0xff]
        %v1642 = vld [vmem:[%s1427 + $0xaa] sm:$0xff]
        %v1643 = vld [vmem:[%s1427 + $0xb2] sm:$0xff]
        %v1644 = vld [vmem:[%s1427 + $0xc2] sm:$0xff]
        %v1645 = vld [vmem:[%s1427 + $0xca] sm:$0xff]
        %v1646 = vld [vmem:[%s1427 + $0xda] sm:$0xff]
        %v1647 = vld [vmem:[%s1427 + $0xe2] sm:$0xff]
        %v1648 = vld [vmem:[%s1427 + $0xf2] sm:$0xff]
        %v1649 = vld [vmem:[%s1427 + $0xfa] sm:$0xff]
        %v1650 = vld [vmem:[%s1427 + $0x10a] sm:$0xff]
        %v1651 = vld [vmem:[%s1427 + $0x112] sm:$0xff]
        %v1652 = vld [vmem:[%s1427 + $0x122] sm:$0xff]
        %v1653 = vld [vmem:[%s1427 + $0x12a] sm:$0xff]
        %v1654 = vld [vmem:[%s1427 + $0x13a] sm:$0xff]
        %v1655 = vld [vmem:[%s1427 + $0x142] sm:$0xff]
        %v1656 = vld [vmem:[%s1427 + $0x152] sm:$0xff]
        %v1657 = vld [vmem:[%s1427 + $0x15a] sm:$0xff]
        %v1658 = vld [vmem:[%s1427 + $0x16a] sm:$0xff]
        %v1659 = vld [vmem:[%s1427 + $0x172] sm:$0xff]
        %v1660 = vlaneseq
        %v1661 = vshrl.u32 %v1660, 7
        %v1662 = vsub.s32 2, %v1661
        %v1663 = vrot.slane %v826, %v1662
        %v1664 = vmul.f32 %v1628, %v1663
        %v1665 = vmul.f32 %v1629, %v1663
        %v1666 = vmul.f32 %v1630, %v1663
        %v1667 = vmul.f32 %v1631, %v1663
        %v1668 = vmul.f32 %v1632, %v1663
        %v1669 = vmul.f32 %v1633, %v1663
        %v1670 = vmul.f32 %v1634, %v1663
        %v1671 = vmul.f32 %v1635, %v1663
        %v1672 = vmul.f32 %v1636, %v1663
        %v1673 = vmul.f32 %v1637, %v1663
        %v1674 = vmul.f32 %v1638, %v1663
        %v1675 = vmul.f32 %v1639, %v1663
        %v1676 = vmul.f32 %v1640, %v1663
        %v1677 = vmul.f32 %v1641, %v1663
        %v1678 = vmul.f32 %v1642, %v1663
        %v1679 = vmul.f32 %v1643, %v1663
        %v1680 = vmul.f32 %v1644, %v1663
        %v1681 = vmul.f32 %v1645, %v1663
        %v1682 = vmul.f32 %v1646, %v1663
        %v1683 = vmul.f32 %v1647, %v1663
        %v1684 = vmul.f32 %v1648, %v1663
        %v1685 = vmul.f32 %v1649, %v1663
        %v1686 = vmul.f32 %v1650, %v1663
        %v1687 = vmul.f32 %v1651, %v1663
        %v1688 = vmul.f32 %v1652, %v1663
        %v1689 = vmul.f32 %v1653, %v1663
        %v1690 = vmul.f32 %v1654, %v1663
        %v1691 = vmul.f32 %v1655, %v1663
        %v1692 = vmul.f32 %v1656, %v1663
        %v1693 = vmul.f32 %v1657, %v1663
        %v1694 = vmul.f32 %v1658, %v1663
        %v1695 = vmul.f32 %v1659, %v1663
        %v1696 = vadd.f32 %v1596, %v1664
        %v1697 = vadd.f32 %v1597, %v1665
        %v1698 = vadd.f32 %v1598, %v1666
        %v1699 = vadd.f32 %v1599, %v1667
        %v1700 = vadd.f32 %v1600, %v1668
        %v1701 = vadd.f32 %v1601, %v1669
        %v1702 = vadd.f32 %v1602, %v1670
        %v1703 = vadd.f32 %v1603, %v1671
        %v1704 = vadd.f32 %v1604, %v1672
        %v1705 = vadd.f32 %v1605, %v1673
        %v1706 = vadd.f32 %v1606, %v1674
        %v1707 = vadd.f32 %v1607, %v1675
        %v1708 = vadd.f32 %v1608, %v1676
        %v1709 = vadd.f32 %v1609, %v1677
        %v1710 = vadd.f32 %v1610, %v1678
        %v1711 = vadd.f32 %v1611, %v1679
        %v1712 = vadd.f32 %v1612, %v1680
        %v1713 = vadd.f32 %v1613, %v1681
        %v1714 = vadd.f32 %v1614, %v1682
        %v1715 = vadd.f32 %v1615, %v1683
        %v1716 = vadd.f32 %v1616, %v1684
        %v1717 = vadd.f32 %v1617, %v1685
        %v1718 = vadd.f32 %v1618, %v1686
        %v1719 = vadd.f32 %v1619, %v1687
        %v1720 = vadd.f32 %v1620, %v1688
        %v1721 = vadd.f32 %v1621, %v1689
        %v1722 = vadd.f32 %v1622, %v1690
        %v1723 = vadd.f32 %v1623, %v1691
        %v1724 = vadd.f32 %v1624, %v1692
        %v1725 = vadd.f32 %v1625, %v1693
        %v1726 = vadd.f32 %v1626, %v1694
        %v1727 = vadd.f32 %v1627, %v1695
        %v1728 = vld [vmem:[%s4 + $0x1] sm:$0x1]
        %v1729 = vlaneseq
        %v1730 = vshrl.u32 %v1729, 7
        %v1731 = vsub.s32 0, %v1730
        %v1732 = vrot.slane %v1728, %v1731
        %v1733 = vadd.f32 %v1696, %v1732
        %v1734 = vadd.f32 %v1697, %v1732
        %v1735 = vadd.f32 %v1698, %v1732
        %v1736 = vadd.f32 %v1699, %v1732
        %v1737 = vadd.f32 %v1700, %v1732
        %v1738 = vadd.f32 %v1701, %v1732
        %v1739 = vadd.f32 %v1702, %v1732
        %v1740 = vadd.f32 %v1703, %v1732
        %v1741 = vadd.f32 %v1704, %v1732
        %v1742 = vadd.f32 %v1705, %v1732
        %v1743 = vadd.f32 %v1706, %v1732
        %v1744 = vadd.f32 %v1707, %v1732
        %v1745 = vadd.f32 %v1708, %v1732
        %v1746 = vadd.f32 %v1709, %v1732
        %v1747 = vadd.f32 %v1710, %v1732
        %v1748 = vadd.f32 %v1711, %v1732
        %v1749 = vadd.f32 %v1712, %v1732
        %v1750 = vadd.f32 %v1713, %v1732
        %v1751 = vadd.f32 %v1714, %v1732
        %v1752 = vadd.f32 %v1715, %v1732
        %v1753 = vadd.f32 %v1716, %v1732
        %v1754 = vadd.f32 %v1717, %v1732
        %v1755 = vadd.f32 %v1718, %v1732
        %v1756 = vadd.f32 %v1719, %v1732
        %v1757 = vadd.f32 %v1720, %v1732
        %v1758 = vadd.f32 %v1721, %v1732
        %v1759 = vadd.f32 %v1722, %v1732
        %v1760 = vadd.f32 %v1723, %v1732
        %v1761 = vadd.f32 %v1724, %v1732
        %v1762 = vadd.f32 %v1725, %v1732
        %v1763 = vadd.f32 %v1726, %v1732
        %v1764 = vadd.f32 %v1727, %v1732
        %v1765 = vmax.f32 %v1733, 0.0
        %v1766 = vmax.f32 %v1734, 0.0
        %v1767 = vmax.f32 %v1735, 0.0
        %v1768 = vmax.f32 %v1736, 0.0
        %v1769 = vmax.f32 %v1737, 0.0
        %v1770 = vmax.f32 %v1738, 0.0
        %v1771 = vmax.f32 %v1739, 0.0
        %v1772 = vmax.f32 %v1740, 0.0
        %v1773 = vmax.f32 %v1741, 0.0
        %v1774 = vmax.f32 %v1742, 0.0
        %v1775 = vmax.f32 %v1743, 0.0
        %v1776 = vmax.f32 %v1744, 0.0
        %v1777 = vmax.f32 %v1745, 0.0
        %v1778 = vmax.f32 %v1746, 0.0
        %v1779 = vmax.f32 %v1747, 0.0
        %v1780 = vmax.f32 %v1748, 0.0
        %v1781 = vmax.f32 %v1749, 0.0
        %v1782 = vmax.f32 %v1750, 0.0
        %v1783 = vmax.f32 %v1751, 0.0
        %v1784 = vmax.f32 %v1752, 0.0
        %v1785 = vmax.f32 %v1753, 0.0
        %v1786 = vmax.f32 %v1754, 0.0
        %v1787 = vmax.f32 %v1755, 0.0
        %v1788 = vmax.f32 %v1756, 0.0
        %v1789 = vmax.f32 %v1757, 0.0
        %v1790 = vmax.f32 %v1758, 0.0
        %v1791 = vmax.f32 %v1759, 0.0
        %v1792 = vmax.f32 %v1760, 0.0
        %v1793 = vmax.f32 %v1761, 0.0
        %v1794 = vmax.f32 %v1762, 0.0
        %v1795 = vmax.f32 %v1763, 0.0
        %v1796 = vmax.f32 %v1764, 0.0
        %v1797 = vmin.f32 %v1765, 6.0
        %v1798 = vmin.f32 %v1766, 6.0
        %v1799 = vmin.f32 %v1767, 6.0
        %v1800 = vmin.f32 %v1768, 6.0
        %v1801 = vmin.f32 %v1769, 6.0
        %v1802 = vmin.f32 %v1770, 6.0
        %v1803 = vmin.f32 %v1771, 6.0
        %v1804 = vmin.f32 %v1772, 6.0
        %v1805 = vmin.f32 %v1773, 6.0
        %v1806 = vmin.f32 %v1774, 6.0
        %v1807 = vmin.f32 %v1775, 6.0
        %v1808 = vmin.f32 %v1776, 6.0
        %v1809 = vmin.f32 %v1777, 6.0
        %v1810 = vmin.f32 %v1778, 6.0
        %v1811 = vmin.f32 %v1779, 6.0
        %v1812 = vmin.f32 %v1780, 6.0
        %v1813 = vmin.f32 %v1781, 6.0
        %v1814 = vmin.f32 %v1782, 6.0
        %v1815 = vmin.f32 %v1783, 6.0
        %v1816 = vmin.f32 %v1784, 6.0
        %v1817 = vmin.f32 %v1785, 6.0
        %v1818 = vmin.f32 %v1786, 6.0
        %v1819 = vmin.f32 %v1787, 6.0
        %v1820 = vmin.f32 %v1788, 6.0
        %v1821 = vmin.f32 %v1789, 6.0
        %v1822 = vmin.f32 %v1790, 6.0
        %v1823 = vmin.f32 %v1791, 6.0
        %v1824 = vmin.f32 %v1792, 6.0
        %v1825 = vmin.f32 %v1793, 6.0
        %v1826 = vmin.f32 %v1794, 6.0
        %v1827 = vmin.f32 %v1795, 6.0
        %v1828 = vmin.f32 %v1796, 6.0
        %v1829 = vld [vmem:[%s3] sm:$0xf]
        %v1830 = vld [vmem:[%s5] sm:$0xf]
        %1832 = vset.pattern.permute.xlu0 0
        %1833 = vperm.xlu0 %1832, %v1830
        %v1834 = vpop.permute.xlu0 %1833
        %v1837 = vsel %vm281, %v1829, 0
        %v1840 = vsel %vm281, %v1797, 0
        %v1843 = vsel %vm281, %v1798, 0
        %v1846 = vsel %vm281, %v1799, 0
        %v1849 = vsel %vm281, %v1800, 0
        %v1852 = vsel %vm281, %v1801, 0
        %v1855 = vsel %vm281, %v1802, 0
        %v1858 = vsel %vm281, %v1803, 0
        %v1861 = vsel %vm281, %v1804, 0
        %v1864 = vsel %vm281, %v1805, 0
        %v1867 = vsel %vm281, %v1806, 0
        %v1870 = vsel %vm281, %v1807, 0
        %v1873 = vsel %vm281, %v1808, 0
        %v1876 = vsel %vm281, %v1809, 0
        %v1879 = vsel %vm281, %v1810, 0
        %v1882 = vsel %vm281, %v1811, 0
        %v1885 = vsel %vm281, %v1812, 0
        %v1888 = vsel %vm281, %v1813, 0
        %v1891 = vsel %vm281, %v1814, 0
        %v1894 = vsel %vm281, %v1815, 0
        %v1897 = vsel %vm281, %v1816, 0
        %v1900 = vsel %vm281, %v1817, 0
        %v1903 = vsel %vm281, %v1818, 0
        %v1906 = vsel %vm281, %v1819, 0
        %v1909 = vsel %vm281, %v1820, 0
        %v1912 = vsel %vm281, %v1821, 0
        %v1915 = vsel %vm281, %v1822, 0
        %v1918 = vsel %vm281, %v1823, 0
        %v1921 = vsel %vm281, %v1824, 0
        %v1924 = vsel %vm281, %v1825, 0
        %v1927 = vsel %vm281, %v1826, 0
        %v1930 = vsel %vm281, %v1827, 0
        %v1933 = vsel %vm281, %v1828, 0
        %1935 = vmatprep.subr.mxu0 0.0
        %1936 = vmatpush1.xpose.msra.mxu0 %v1840
        %1937 = vmatprep.subr.mxu0 0.0
        %1938 = vmatpush1.xpose.msra.mxu0 %v1843
        %1939 = vmatprep.subr.mxu0 0.0
        %1940 = vmatpush1.xpose.msra.mxu0 %v1846
        %1941 = vmatprep.subr.mxu0 0.0
        %1942 = vmatpush1.xpose.msra.mxu0 %v1849
        %1943 = vmatprep.subr.mxu0 0.0
        %1944 = vmatpush1.xpose.msra.mxu0 %v1852
        %1945 = vmatprep.subr.mxu0 0.0
        %1946 = vmatpush1.xpose.msra.mxu0 %v1855
        %1947 = vmatprep.subr.mxu0 0.0
        %1948 = vmatpush1.xpose.msra.mxu0 %v1858
        %1949 = vmatprep.subr.mxu0 0.0
        %1950 = vmatpush1.xpose.msra.mxu0 %v1861
        %1951 = vmatprep.subr.mxu0 0.0
        %1952 = vmatpush1.xpose.msra.mxu0 %v1864
        %1953 = vmatprep.subr.mxu0 0.0
        %1954 = vmatpush1.xpose.msra.mxu0 %v1867
        %1955 = vmatprep.subr.mxu0 0.0
        %1956 = vmatpush1.xpose.msra.mxu0 %v1870
        %1957 = vmatprep.subr.mxu0 0.0
        %1958 = vmatpush1.xpose.msra.mxu0 %v1873
        %1959 = vmatprep.subr.mxu0 0.0
        %1960 = vmatpush1.xpose.msra.mxu0 %v1876
        %1961 = vmatprep.subr.mxu0 0.0
        %1962 = vmatpush1.xpose.msra.mxu0 %v1879
        %1963 = vmatprep.subr.mxu0 0.0
        %1964 = vmatpush1.xpose.msra.mxu0 %v1882
        %1965 = vmatprep.subr.mxu0 0.0
        %1966 = vmatpush1.xpose.msra.mxu0 %v1885
        %1967 = vmatprep.subr.mxu0 0.0
        %1968 = vmatpush1.xpose.msra.mxu0 %v1888
        %1969 = vmatprep.subr.mxu0 0.0
        %1970 = vmatpush1.xpose.msra.mxu0 %v1891
        %1971 = vmatprep.subr.mxu0 0.0
        %1972 = vmatpush1.xpose.msra.mxu0 %v1894
        %1973 = vmatprep.subr.mxu0 0.0
        %1974 = vmatpush1.xpose.msra.mxu0 %v1897
        %1975 = vmatprep.subr.mxu0 0.0
        %1976 = vmatpush1.xpose.msra.mxu0 %v1900
        %1977 = vmatprep.subr.mxu0 0.0
        %1978 = vmatpush1.xpose.msra.mxu0 %v1903
        %1979 = vmatprep.subr.mxu0 0.0
        %1980 = vmatpush1.xpose.msra.mxu0 %v1906
        %1981 = vmatprep.subr.mxu0 0.0
        %1982 = vmatpush1.xpose.msra.mxu0 %v1909
        %1983 = vmatprep.subr.mxu0 0.0
        %1984 = vmatpush1.xpose.msra.mxu0 %v1912
        %1985 = vmatprep.subr.mxu0 0.0
        %1986 = vmatpush1.xpose.msra.mxu0 %v1915
        %1987 = vmatprep.subr.mxu0 0.0
        %1988 = vmatpush1.xpose.msra.mxu0 %v1918
        %1989 = vmatprep.subr.mxu0 0.0
        %1990 = vmatpush1.xpose.msra.mxu0 %v1921
        %1991 = vmatprep.subr.mxu0 0.0
        %1992 = vmatpush1.xpose.msra.mxu0 %v1924
        %1993 = vmatprep.subr.mxu0 0.0
        %1994 = vmatpush1.xpose.msra.mxu0 %v1927
        %1995 = vmatprep.subr.mxu0 0.0
        %1996 = vmatpush1.xpose.msra.mxu0 %v1930
        %1997 = vmatprep.subr.mxu0 0.0
        %1998 = vmatpush1.xpose.msra.mxu0 %v1933
        %1999 = vmatprep.mubr.f32.mxu0 0.0
        %2000 = vmatmul.mubr.f32.gmra.mrb[0].mxu0 %v1837
        %v2001 = vpop.f32.mrb[0].mxu0
        %v2002 = vadd.f32 %v1834, %v2001
        %v2003 = vpop.f32.mrb[0].mxu0
        %v2004 = vadd.f32 %v1834, %v2003
        %2005 = vdwg.mxu0
        %v2006 = vadd.f32 %v2002, %v327
        %v2007 = vadd.f32 %v2004, %v335
        %v2010 = vcombine.low %v2006, %v2007
        %2012 = vst [vmem:[%s280] sm:$0xff] %v2010
        %s2013 = sand.u32 %s163, 1
        %s2014 = scalar_lea.sflag [#allocation5], %s2013
        %s2015 = sand.u32 %s163, 1
        %s2016 = smul.addr %s2015, 8
        %s2017 = scalar_lea.vmem [#allocation8], %s2016
        // Predicated region
        $region53: #{tpu_custom_call.1} parent=43 // pred_check
          %p2018 = pneg %p173
        $region54: #{tpu_custom_call.1} parent=43 // pred_check_branch
          %2020 = sbr.rel (%p2018) target = $region56
        $region55: #{tpu_custom_call.1} parent=43 // pred_region
          %s2022 = ssub.s32 128, 128
          %2023 = vsyncadd %s2014, %s2022
          %s2024 = smul.addr %s24, 2
          %s2025 = smul.addr %s2024, 64
          %s2026 = scalar_lea.hbm %s6, %s2025
          %s2028 = sshll.u32 %s2017, 4
          %s2029 = int_to_ptr.vmem [resolvable:$true] %s2028
          %2031 = dma.vmem_to_hbm [thread:$0]  %s2029, 128, %s2026, %s2014
        $region56: #{tpu_custom_call.1} parent=43 // pred_fallthru
          _
      $region44: #{tpu_custom_call.1} parent=5 // pred_fallthru
        _
      %p2032 = scmp.le.s32.totalorder 2, %s19
      // Predicated region
      $region57: #{tpu_custom_call.1} parent=5 // pred_check
        %p2033 = pneg %p2032
      $region58: #{tpu_custom_call.1} parent=5 // pred_check_branch
        %2035 = sbr.rel (%p2033) target = $region60
      $region59: #{tpu_custom_call.1} parent=5 // pred_region
        %s2036 = ssub.s32 %s19, 2
        // Predicated region
        $region61: #{tpu_custom_call.1} parent=59 // pred_check
          %p2037 = pneg %p179
        $region62: #{tpu_custom_call.1} parent=59 // pred_check_branch
          %2039 = sbr.rel (%p2037) target = $region64
        $region63: #{tpu_custom_call.1} parent=59 // pred_region
          %s2040 = sand.u32 %s164, 1
          %s2041 = scalar_lea.sflag [#allocation5], %s2040
          %s2042 = sand.u32 %s164, 1
          %s2043 = smul.addr %s2042, 8
          %s2044 = scalar_lea.vmem [#allocation8], %s2043
          %2045 = dma.done %s2041, 128
        $region64: #{tpu_custom_call.1} parent=59 // pred_fallthru
          _
      $region60: #{tpu_custom_call.1} parent=5 // pred_fallthru
        _
    $region6: #{tpu_custom_call.1} parent=1 // loop_footer
      %s23 = sadd.s32 1, %s19
    $region7: #{tpu_custom_call.1} parent=1 // loop_footer_branch
      %18 = sbr.rel target = $region3
    $region8: #{tpu_custom_call.1} parent=1 // loop_exit
      _
    %2046 = vsyncpa [#allocation4], 1
    %s2047 = scalar_lea.sflag [#allocation4], 1
    %2048 = vsyncpa %s2047, 1
    %2049 = vsyncpa [#allocation7], 1
    %2050 = vsyncpa [#allocation5], 1
    %s2051 = scalar_lea.sflag [#allocation5], 1
    %2052 = vsyncpa %s2051, 1

</llo_original>
